<compile_context>
chip_gen: v6e
topology: v6e:2x2x1
jax: 0.10.0
libtpu: 0.0.40
codegen_flags: <defaults>
</compile_context>

<pallas_src>
import functools

import jax
import jax.numpy as jnp
from jax.experimental import pallas as pl
from jax.experimental.pallas import tpu as pltpu


def _round_up(x, m):
    return (x + m - 1) // m * m


# ---------------------------------------------------------------------------
# Pallas kernel: fused matmul + bias + activation (the compute hot path)
# ---------------------------------------------------------------------------
def _matmul_bias_act_kernel(x_ref, w_ref, b_ref, o_ref, *, act):
    y = jnp.dot(x_ref[...], w_ref[...], preferred_element_type=jnp.float32)
    y = y + b_ref[...]                      # (TM, N) + (1, N) broadcast, f32
    if act == "relu":
        y = jnp.maximum(y, 0.0)
    elif act == "sigmoid":
        y = pl.reciprocal(1.0 + jnp.exp(-y), approx=False)
    o_ref[...] = y.astype(o_ref.dtype)


def pallas_matmul_bias_act(x, w, b_row, act, out_dtype, tm=1024):
    """x: (M, K) -> bf16, w: (K, N) bf16, b_row: (1, N) f32 -> (M, N) out_dtype."""
    M, K = x.shape
    K2, N = w.shape
    assert K == K2 and b_row.shape == (1, N)

    x = x.astype(jnp.bfloat16)
    TM = min(tm, _round_up(M, 16))          # multiple of 16 (bf16 sublane tile)
    Mp = _round_up(M, TM)
    if Mp != M:
        x = jnp.pad(x, ((0, Mp - M), (0, 0)))

    kernel = functools.partial(_matmul_bias_act_kernel, act=act)
    out = pl.pallas_call(
        kernel,
        out_shape=jax.ShapeDtypeStruct((Mp, N), out_dtype),
        grid=(Mp // TM,),
        in_specs=[
            pl.BlockSpec((TM, K), lambda i: (i, 0)),   # M-tiled patches
            pl.BlockSpec((K, N), lambda i: (0, 0)),    # full weight, reused
            pl.BlockSpec((1, N), lambda i: (0, 0)),    # bias row, reused
        ],
        out_specs=pl.BlockSpec((TM, N), lambda i: (i, 0)),
        compiler_params=pltpu.CompilerParams(
            dimension_semantics=("parallel",)),
    )(x, w, b_row)
    return out[:M] if Mp != M else out


# ---------------------------------------------------------------------------
# Layer wrappers (plain-JAX glue: padding / strided slicing / interleave)
# ---------------------------------------------------------------------------
def conv2d_s2p1(x_nhwc, w_mat, b_row, act, out_dtype):
    """nn.Conv2d(kernel=3, stride=2, padding=1) + activation, via im2col."""
    N, H, W, C = x_nhwc.shape
    xp = jnp.pad(x_nhwc, ((0, 0), (1, 1), (1, 1), (0, 0)))
    Ho, Wo = (H - 1) // 2 + 1, (W - 1) // 2 + 1
    cols = [xp[:, i:i + 2 * (Ho - 1) + 1:2, j:j + 2 * (Wo - 1) + 1:2, :]
            for i in range(3) for j in range(3)]
    patches = jnp.concatenate(cols, axis=-1).reshape(N * Ho * Wo, 9 * C)
    y = pallas_matmul_bias_act(patches, w_mat, b_row, act, out_dtype)
    return y.reshape(N, Ho, Wo, w_mat.shape[1])


def conv_transpose2d_s2p1op1(x_nhwc, w_mat, b_row, act, out_dtype):
    """nn.ConvTranspose2d(k=3, s=2, p=1, output_padding=1) + act.

    Sub-pixel phase formulation: a single matmul of the 2x2 input
    neighbourhood (K = 4*Cin) against the pre-packed phase-block weight
    (4*Cin, 4*Cout) yields all four output phases, which are interleaved.
    """
    N, H, W, C = x_nhwc.shape
    Cout = w_mat.shape[1] // 4
    xp = jnp.pad(x_nhwc, ((0, 0), (0, 1), (0, 1), (0, 0)))  # zero row/col at end
    neigh = jnp.concatenate(
        [xp[:, :H, :W, :],              # x[m,   n  ]
         xp[:, :H, 1:W + 1, :],         # x[m,   n+1]
         xp[:, 1:H + 1, :W, :],         # x[m+1, n  ]
         xp[:, 1:H + 1, 1:W + 1, :]],   # x[m+1, n+1]
        axis=-1).reshape(N * H * W, 4 * C)
    y = pallas_matmul_bias_act(neigh, w_mat, b_row, act, out_dtype)
    y = y.reshape(N, H, W, 2, 2, Cout)              # (..., dr, dc, Cout)
    y = jnp.transpose(y, (0, 1, 3, 2, 4, 5)).reshape(N, 2 * H, 2 * W, Cout)
    return y


# ---------------------------------------------------------------------------
# One-time weight packing (hoisted out of the forward path)
# ---------------------------------------------------------------------------
def _pack_conv(w_oihw, b):
    """(Cout,Cin,3,3) -> (9*Cin, Cout) bf16 matching (kh,kw,C) patch order."""
    cout = w_oihw.shape[0]
    w_mat = jnp.transpose(w_oihw, (2, 3, 1, 0)).reshape(-1, cout)
    return w_mat.astype(jnp.bfloat16), b.reshape(1, -1).astype(jnp.float32)


def _pack_conv_transpose(w_iohw, b):
    """(Cin,Cout,3,3) -> phase-block weight (4*Cin, 4*Cout) bf16 + bias row.

    Patch blocks : 0 -> x[m,n], 1 -> x[m,n+1], 2 -> x[m+1,n], 3 -> x[m+1,n+1].
    Phase blocks : 0 -> (even,even), 1 -> (even,odd), 2 -> (odd,even), 3 -> (odd,odd).
    Derived from oh = 2*ih - 1 + kh (stride 2, padding 1, output_padding 1).
    """
    cin, cout = w_iohw.shape[:2]
    wm = jnp.zeros((4 * cin, 4 * cout), jnp.float32)
    taps = {  # (patch_block, phase_block) -> kernel tap (kh, kw)
        (0, 0): (1, 1),
        (1, 1): (1, 0), (0, 1): (1, 2),
        (2, 2): (0, 1), (0, 2): (2, 1),
        (3, 3): (0, 0), (2, 3): (0, 2), (1, 3): (2, 0), (0, 3): (2, 2),
    }
    for (pb, ob), (kh, kw) in taps.items():
        wm = wm.at[pb * cin:(pb + 1) * cin,
                   ob * cout:(ob + 1) * cout].set(w_iohw[:, :, kh, kw])
    b_row = jnp.tile(b, 4).reshape(1, -1).astype(jnp.float32)
    return wm.astype(jnp.bfloat16), b_row


def pack_params(params):
    packed = {}
    for name in ("e1", "e2", "e3"):
        packed[name] = _pack_conv(params[name + "_w"], params[name + "_b"])
    for name in ("d1", "d2", "d3"):
        packed[name] = _pack_conv_transpose(params[name + "_w"],
                                            params[name + "_b"])
    return packed


# ---------------------------------------------------------------------------
# Parameter init (deterministic, synthetic)
# ---------------------------------------------------------------------------
def init_params(key):
    def mk(key, shape, fan_in):
        scale = (1.0 / fan_in) ** 0.5
        return jax.random.uniform(key, shape, jnp.float32, -scale, scale)

    ks = jax.random.split(key, 12)
    return {
        # encoder Conv2d weights: (Cout, Cin, 3, 3)
        "e1_w": mk(ks[0], (16, 1, 3, 3), 1 * 9),   "e1_b": mk(ks[1], (16,), 1 * 9),
        "e2_w": mk(ks[2], (32, 16, 3, 3), 16 * 9), "e2_b": mk(ks[3], (32,), 16 * 9),
        "e3_w": mk(ks[4], (64, 32, 3, 3), 32 * 9), "e3_b": mk(ks[5], (64,), 32 * 9),
        # decoder ConvTranspose2d weights: (Cin, Cout, 3, 3)
        "d1_w": mk(ks[6], (64, 32, 3, 3), 64 * 9), "d1_b": mk(ks[7], (32,), 64 * 9),
        "d2_w": mk(ks[8], (32, 16, 3, 3), 32 * 9), "d2_b": mk(ks[9], (16,), 32 * 9),
        "d3_w": mk(ks[10], (16, 1, 3, 3), 16 * 9), "d3_b": mk(ks[11], (1,), 16 * 9),
    }


# ---------------------------------------------------------------------------
# Forward pass (matches PneumoniaAutoencoder.forward)
# ---------------------------------------------------------------------------
def pneumonia_autoencoder_forward(packed, x_nchw):
    x = jnp.transpose(x_nchw, (0, 2, 3, 1)).astype(jnp.bfloat16)  # NCHW->NHWC
    # encoder
    x = conv2d_s2p1(x, *packed["e1"], "relu", jnp.bfloat16)
    x = conv2d_s2p1(x, *packed["e2"], "relu", jnp.bfloat16)
    x = conv2d_s2p1(x, *packed["e3"], "relu", jnp.bfloat16)
    # decoder
    x = conv_transpose2d_s2p1op1(x, *packed["d1"], "relu", jnp.bfloat16)
    x = conv_transpose2d_s2p1op1(x, *packed["d2"], "relu", jnp.bfloat16)
    x = conv_transpose2d_s2p1op1(x, *packed["d3"], "sigmoid", jnp.float32)
    return jnp.transpose(x, (0, 3, 1, 2))                          # NHWC->NCHW


# ---------------------------------------------------------------------------
# References for correctness checks
# ---------------------------------------------------------------------------
@jax.jit
def _ref_forward_f32(params, x_nchw):
    """Pure-f32 lax reference (semantics of the PyTorch module)."""
    dn = jax.lax.conv_dimension_numbers(x_nchw.shape, (1, 1, 3, 3),
                                        ("NCHW", "OIHW", "NCHW"))

    def conv(x, w, b):
        y = jax.lax.conv_general_dilated(x, w, (2, 2), ((1, 1), (1, 1)),
                                         dimension_numbers=dn)
        return y + b[None, :, None, None]

    def convT(x, w_io, b):
        w = jnp.transpose(w_io[:, :, ::-1, ::-1], (1, 0, 2, 3))
        y = jax.lax.conv_general_dilated(x, w, (1, 1), ((1, 2), (1, 2)),
                                         lhs_dilation=(2, 2),
                                         dimension_numbers=dn)
        return y + b[None, :, None, None]

    x = jax.nn.relu(conv(x_nchw, params["e1_w"], params["e1_b"]))
    x = jax.nn.relu(conv(x, params["e2_w"], params["e2_b"]))
    x = jax.nn.relu(conv(x, params["e3_w"], params["e3_b"]))
    x = jax.nn.relu(convT(x, params["d1_w"], params["d1_b"]))
    x = jax.nn.relu(convT(x, params["d2_w"], params["d2_b"]))
    x = jax.nn.sigmoid(convT(x, params["d3_w"], params["d3_b"]))
    return x


@jax.jit
def _ref_forward_bf16(params, x_nchw):
    """lax reference with the same bf16-input / f32-accumulate arithmetic."""
    dn = jax.lax.conv_dimension_numbers(x_nchw.shape, (1, 1, 3, 3),
                                        ("NCHW", "OIHW", "NCHW"))
    bf = jnp.bfloat16

    def conv(x, w, b):
        y = jax.lax.conv_general_dilated(x.astype(bf), w.astype(bf), (2, 2),
                                         ((1, 1), (1, 1)), dimension_numbers=dn,
                                         preferred_element_type=jnp.float32)
        return y + b[None, :, None, None]

    def convT(x, w_io, b):
        w = jnp.transpose(w_io[:, :, ::-1, ::-1], (1, 0, 2, 3))
        y = jax.lax.conv_general_dilated(x.astype(bf), w.astype(bf), (1, 1),
                                         ((1, 2), (1, 2)), lhs_dilation=(2, 2),
                                         dimension_numbers=dn,
                                         preferred_element_type=jnp.float32)
        return y + b[None, :, None, None]

    x = jax.nn.relu(conv(x_nchw, params["e1_w"], params["e1_b"])).astype(bf)
    x = jax.nn.relu(conv(x, params["e2_w"], params["e2_b"])).astype(bf)
    x = jax.nn.relu(conv(x, params["e3_w"], params["e3_b"])).astype(bf)
    x = jax.nn.relu(convT(x, params["d1_w"], params["d1_b"])).astype(bf)
    x = jax.nn.relu(convT(x, params["d2_w"], params["d2_b"])).astype(bf)
    x = jax.nn.sigmoid(convT(x, params["d3_w"], params["d3_b"]))
    return x.astype(jnp.float32)


if __name__ == "__main__":
    key = jax.random.PRNGKey(0)
    k_param, k_x = jax.random.split(key)
    params = init_params(k_param)
    packed = pack_params(params)                       # one-time weight packing
    x = jax.random.uniform(k_x, (2, 1, 16, 16), jnp.float32)  # NCHW, 1 channel

    fwd = jax.jit(pneumonia_autoencoder_forward)
    out = jax.block_until_ready(fwd(packed, x))
    assert out.shape == (2, 1, 16, 16), out.shape

    ref_bf16 = jax.block_until_ready(_ref_forward_bf16(params, x))
    ref_f32 = jax.block_until_ready(_ref_forward_f32(params, x))
    err_bf16 = float(jnp.max(jnp.abs(out - ref_bf16)))
    err_f32 = float(jnp.max(jnp.abs(out - ref_f32)))
    # tight check against a bf16-matched reference, loose vs the pure-f32 spec
    assert jnp.allclose(out, ref_bf16, atol=3e-3, rtol=3e-3), err_bf16
    assert jnp.allclose(out, ref_f32, atol=3e-2, rtol=3e-2), err_f32

    print("KERNEL_OK")
</pallas_src>

<mosaic_0001>
module attributes {stable_mosaic.version = 11 : i64} {
  func.func @_matmul_bias_act_kernel(%arg0: i32, %arg1: memref<128x9xbf16, #tpu.memory_space<vmem>>, %arg2: memref<9x16xbf16, #tpu.memory_space<vmem>>, %arg3: memref<1x16xf32, #tpu.memory_space<vmem>>, %arg4: memref<128x16xbf16, #tpu.memory_space<vmem>>) attributes {dimension_semantics = [#tpu.dimension_semantics<parallel>], iteration_bounds = array<i64: 1>, scalar_prefetch = 0 : i64, scratch_operands = 0 : i64, tpu.core_type = #tpu.core_type<tc>, window_params = [{transform_indices = @transform_0, window_bounds = array<i64: 128, 9>}, {pipeline_mode = #tpu.pipeline_mode<synchronous>, transform_indices = @transform_1, window_bounds = array<i64: 9, 16>}, {pipeline_mode = #tpu.pipeline_mode<synchronous>, transform_indices = @transform_2, window_bounds = array<i64: 1, 16>}, {transform_indices = @transform_3, window_bounds = array<i64: 128, 16>}]} {
    %c0 = arith.constant 0 : index
    %c0_0 = arith.constant 0 : index
    %0 = vector.load %arg1[%c0, %c0_0] : memref<128x9xbf16, #tpu.memory_space<vmem>>, vector<128x9xbf16>
    %c0_1 = arith.constant 0 : index
    %c0_2 = arith.constant 0 : index
    %1 = vector.load %arg2[%c0_1, %c0_2] : memref<9x16xbf16, #tpu.memory_space<vmem>>, vector<9x16xbf16>
    %cst = arith.constant dense<0.000000e+00> : vector<128x16xf32>
    %2 = tpu.matmul %0, %1, %cst {dimension_numbers = #tpu.dot_dimension_numbers<[1], [0], [0], [1], [0, 0, 1, 1], [], []>} : vector<128x9xbf16>, vector<9x16xbf16>, vector<128x16xf32> -> vector<128x16xf32>
    %c0_3 = arith.constant 0 : index
    %c0_4 = arith.constant 0 : index
    %3 = vector.load %arg3[%c0_3, %c0_4] : memref<1x16xf32, #tpu.memory_space<vmem>>, vector<1x16xf32>
    %4 = vector.broadcast %3 : vector<1x16xf32> to vector<128x16xf32>
    %5 = arith.addf %2, %4 : vector<128x16xf32>
    %cst_5 = arith.constant 0.000000e+00 : f32
    %6 = vector.broadcast %cst_5 : f32 to vector<128x16xf32>
    %7 = arith.maximumf %5, %6 : vector<128x16xf32>
    %8 = arith.truncf %7 : vector<128x16xf32> to vector<128x16xbf16>
    %c0_6 = arith.constant 0 : index
    %c0_7 = arith.constant 0 : index
    %9 = vector.load %arg4[%c0_6, %c0_7] : memref<128x16xbf16, #tpu.memory_space<vmem>>, vector<128x16xbf16>
    tpu.vector_store %arg4[%c0_6, %c0_7], %8 {strides = array<i32>} : memref<128x16xbf16, #tpu.memory_space<vmem>>, vector<128x16xbf16>,
    return
  }
  func.func @transform_0(%arg0: i32) -> (i32, i32) {
    %c0_i32 = arith.constant 0 : i32
    %c0_i32_0 = arith.constant 0 : i32
    return %arg0, %c0_i32 : i32, i32
  }
  func.func @transform_1(%arg0: i32) -> (i32, i32) {
    %c0_i32 = arith.constant 0 : i32
    %c0_i32_0 = arith.constant 0 : i32
    %c0_i32_1 = arith.constant 0 : i32
    return %c0_i32, %c0_i32_0 : i32, i32
  }
  func.func @transform_2(%arg0: i32) -> (i32, i32) {
    %c0_i32 = arith.constant 0 : i32
    %c0_i32_0 = arith.constant 0 : i32
    %c0_i32_1 = arith.constant 0 : i32
    return %c0_i32, %c0_i32_0 : i32, i32
  }
  func.func @transform_3(%arg0: i32) -> (i32, i32) {
    %c0_i32 = arith.constant 0 : i32
    %c0_i32_0 = arith.constant 0 : i32
    return %arg0, %c0_i32 : i32, i32
  }
}

module attributes {stable_mosaic.version = 11 : i64} {
  func.func @_matmul_bias_act_kernel(%arg0: i32, %arg1: memref<32x144xbf16, #tpu.memory_space<vmem>>, %arg2: memref<144x32xbf16, #tpu.memory_space<vmem>>, %arg3: memref<1x32xf32, #tpu.memory_space<vmem>>, %arg4: memref<32x32xbf16, #tpu.memory_space<vmem>>) attributes {dimension_semantics = [#tpu.dimension_semantics<parallel>], iteration_bounds = array<i64: 1>, scalar_prefetch = 0 : i64, scratch_operands = 0 : i64, tpu.core_type = #tpu.core_type<tc>, window_params = [{transform_indices = @transform_0, window_bounds = array<i64: 32, 144>}, {pipeline_mode = #tpu.pipeline_mode<synchronous>, transform_indices = @transform_1, window_bounds = array<i64: 144, 32>}, {pipeline_mode = #tpu.pipeline_mode<synchronous>, transform_indices = @transform_2, window_bounds = array<i64: 1, 32>}, {transform_indices = @transform_3, window_bounds = array<i64: 32, 32>}]} {
    %c0 = arith.constant 0 : index
    %c0_0 = arith.constant 0 : index
    %0 = vector.load %arg1[%c0, %c0_0] : memref<32x144xbf16, #tpu.memory_space<vmem>>, vector<32x144xbf16>
    %c0_1 = arith.constant 0 : index
    %c0_2 = arith.constant 0 : index
    %1 = vector.load %arg2[%c0_1, %c0_2] : memref<144x32xbf16, #tpu.memory_space<vmem>>, vector<144x32xbf16>
    %cst = arith.constant dense<0.000000e+00> : vector<32x32xf32>
    %2 = tpu.matmul %0, %1, %cst {dimension_numbers = #tpu.dot_dimension_numbers<[1], [0], [0], [1], [0, 0, 1, 1], [], []>} : vector<32x144xbf16>, vector<144x32xbf16>, vector<32x32xf32> -> vector<32x32xf32>
    %c0_3 = arith.constant 0 : index
    %c0_4 = arith.constant 0 : index
    %3 = vector.load %arg3[%c0_3, %c0_4] : memref<1x32xf32, #tpu.memory_space<vmem>>, vector<1x32xf32>
    %4 = vector.broadcast %3 : vector<1x32xf32> to vector<32x32xf32>
    %5 = arith.addf %2, %4 : vector<32x32xf32>
    %cst_5 = arith.constant 0.000000e+00 : f32
    %6 = vector.broadcast %cst_5 : f32 to vector<32x32xf32>
    %7 = arith.maximumf %5, %6 : vector<32x32xf32>
    %8 = arith.truncf %7 : vector<32x32xf32> to vector<32x32xbf16>
    %c0_6 = arith.constant 0 : index
    %c0_7 = arith.constant 0 : index
    %9 = vector.load %arg4[%c0_6, %c0_7] : memref<32x32xbf16, #tpu.memory_space<vmem>>, vector<32x32xbf16>
    tpu.vector_store %arg4[%c0_6, %c0_7], %8 {strides = array<i32>} : memref<32x32xbf16, #tpu.memory_space<vmem>>, vector<32x32xbf16>,
    return
  }
  func.func @transform_0(%arg0: i32) -> (i32, i32) {
    %c0_i32 = arith.constant 0 : i32
    %c0_i32_0 = arith.constant 0 : i32
    return %arg0, %c0_i32 : i32, i32
  }
  func.func @transform_1(%arg0: i32) -> (i32, i32) {
    %c0_i32 = arith.constant 0 : i32
    %c0_i32_0 = arith.constant 0 : i32
    %c0_i32_1 = arith.constant 0 : i32
    return %c0_i32, %c0_i32_0 : i32, i32
  }
  func.func @transform_2(%arg0: i32) -> (i32, i32) {
    %c0_i32 = arith.constant 0 : i32
    %c0_i32_0 = arith.constant 0 : i32
    %c0_i32_1 = arith.constant 0 : i32
    return %c0_i32, %c0_i32_0 : i32, i32
  }
  func.func @transform_3(%arg0: i32) -> (i32, i32) {
    %c0_i32 = arith.constant 0 : i32
    %c0_i32_0 = arith.constant 0 : i32
    return %arg0, %c0_i32 : i32, i32
  }
}

module attributes {stable_mosaic.version = 11 : i64} {
  func.func @_matmul_bias_act_kernel(%arg0: i32, %arg1: memref<16x288xbf16, #tpu.memory_space<vmem>>, %arg2: memref<288x64xbf16, #tpu.memory_space<vmem>>, %arg3: memref<1x64xf32, #tpu.memory_space<vmem>>, %arg4: memref<16x64xbf16, #tpu.memory_space<vmem>>) attributes {dimension_semantics = [#tpu.dimension_semantics<parallel>], iteration_bounds = array<i64: 1>, scalar_prefetch = 0 : i64, scratch_operands = 0 : i64, tpu.core_type = #tpu.core_type<tc>, window_params = [{transform_indices = @transform_0, window_bounds = array<i64: 16, 288>}, {pipeline_mode = #tpu.pipeline_mode<synchronous>, transform_indices = @transform_1, window_bounds = array<i64: 288, 64>}, {pipeline_mode = #tpu.pipeline_mode<synchronous>, transform_indices = @transform_2, window_bounds = array<i64: 1, 64>}, {transform_indices = @transform_3, window_bounds = array<i64: 16, 64>}]} {
    %c0 = arith.constant 0 : index
    %c0_0 = arith.constant 0 : index
    %0 = vector.load %arg1[%c0, %c0_0] : memref<16x288xbf16, #tpu.memory_space<vmem>>, vector<16x288xbf16>
    %c0_1 = arith.constant 0 : index
    %c0_2 = arith.constant 0 : index
    %1 = vector.load %arg2[%c0_1, %c0_2] : memref<288x64xbf16, #tpu.memory_space<vmem>>, vector<288x64xbf16>
    %cst = arith.constant dense<0.000000e+00> : vector<16x64xf32>
    %2 = tpu.matmul %0, %1, %cst {dimension_numbers = #tpu.dot_dimension_numbers<[1], [0], [0], [1], [0, 0, 1, 1], [], []>} : vector<16x288xbf16>, vector<288x64xbf16>, vector<16x64xf32> -> vector<16x64xf32>
    %c0_3 = arith.constant 0 : index
    %c0_4 = arith.constant 0 : index
    %3 = vector.load %arg3[%c0_3, %c0_4] : memref<1x64xf32, #tpu.memory_space<vmem>>, vector<1x64xf32>
    %4 = vector.broadcast %3 : vector<1x64xf32> to vector<16x64xf32>
    %5 = arith.addf %2, %4 : vector<16x64xf32>
    %cst_5 = arith.constant 0.000000e+00 : f32
    %6 = vector.broadcast %cst_5 : f32 to vector<16x64xf32>
    %7 = arith.maximumf %5, %6 : vector<16x64xf32>
    %8 = arith.truncf %7 : vector<16x64xf32> to vector<16x64xbf16>
    %c0_6 = arith.constant 0 : index
    %c0_7 = arith.constant 0 : index
    %9 = vector.load %arg4[%c0_6, %c0_7] : memref<16x64xbf16, #tpu.memory_space<vmem>>, vector<16x64xbf16>
    tpu.vector_store %arg4[%c0_6, %c0_7], %8 {strides = array<i32>} : memref<16x64xbf16, #tpu.memory_space<vmem>>, vector<16x64xbf16>,
    return
  }
  func.func @transform_0(%arg0: i32) -> (i32, i32) {
    %c0_i32 = arith.constant 0 : i32
    %c0_i32_0 = arith.constant 0 : i32
    return %arg0, %c0_i32 : i32, i32
  }
  func.func @transform_1(%arg0: i32) -> (i32, i32) {
    %c0_i32 = arith.constant 0 : i32
    %c0_i32_0 = arith.constant 0 : i32
    %c0_i32_1 = arith.constant 0 : i32
    return %c0_i32, %c0_i32_0 : i32, i32
  }
  func.func @transform_2(%arg0: i32) -> (i32, i32) {
    %c0_i32 = arith.constant 0 : i32
    %c0_i32_0 = arith.constant 0 : i32
    %c0_i32_1 = arith.constant 0 : i32
    return %c0_i32, %c0_i32_0 : i32, i32
  }
  func.func @transform_3(%arg0: i32) -> (i32, i32) {
    %c0_i32 = arith.constant 0 : i32
    %c0_i32_0 = arith.constant 0 : i32
    return %arg0, %c0_i32 : i32, i32
  }
}

module attributes {stable_mosaic.version = 11 : i64} {
  func.func @_matmul_bias_act_kernel(%arg0: i32, %arg1: memref<16x256xbf16, #tpu.memory_space<vmem>>, %arg2: memref<256x128xbf16, #tpu.memory_space<vmem>>, %arg3: memref<1x128xf32, #tpu.memory_space<vmem>>, %arg4: memref<16x128xbf16, #tpu.memory_space<vmem>>) attributes {dimension_semantics = [#tpu.dimension_semantics<parallel>], iteration_bounds = array<i64: 1>, scalar_prefetch = 0 : i64, scratch_operands = 0 : i64, tpu.core_type = #tpu.core_type<tc>, window_params = [{transform_indices = @transform_0, window_bounds = array<i64: 16, 256>}, {pipeline_mode = #tpu.pipeline_mode<synchronous>, transform_indices = @transform_1, window_bounds = array<i64: 256, 128>}, {pipeline_mode = #tpu.pipeline_mode<synchronous>, transform_indices = @transform_2, window_bounds = array<i64: 1, 128>}, {transform_indices = @transform_3, window_bounds = array<i64: 16, 128>}]} {
    %c0 = arith.constant 0 : index
    %c0_0 = arith.constant 0 : index
    %0 = vector.load %arg1[%c0, %c0_0] : memref<16x256xbf16, #tpu.memory_space<vmem>>, vector<16x256xbf16>
    %c0_1 = arith.constant 0 : index
    %c0_2 = arith.constant 0 : index
    %1 = vector.load %arg2[%c0_1, %c0_2] : memref<256x128xbf16, #tpu.memory_space<vmem>>, vector<256x128xbf16>
    %cst = arith.constant dense<0.000000e+00> : vector<16x128xf32>
    %2 = tpu.matmul %0, %1, %cst {dimension_numbers = #tpu.dot_dimension_numbers<[1], [0], [0], [1], [0, 0, 1, 1], [], []>} : vector<16x256xbf16>, vector<256x128xbf16>, vector<16x128xf32> -> vector<16x128xf32>
    %c0_3 = arith.constant 0 : index
    %c0_4 = arith.constant 0 : index
    %3 = vector.load %arg3[%c0_3, %c0_4] : memref<1x128xf32, #tpu.memory_space<vmem>>, vector<1x128xf32>
    %4 = vector.broadcast %3 : vector<1x128xf32> to vector<16x128xf32>
    %5 = arith.addf %2, %4 : vector<16x128xf32>
    %cst_5 = arith.constant 0.000000e+00 : f32
    %6 = vector.broadcast %cst_5 : f32 to vector<16x128xf32>
    %7 = arith.maximumf %5, %6 : vector<16x128xf32>
    %8 = arith.truncf %7 : vector<16x128xf32> to vector<16x128xbf16>
    %c0_6 = arith.constant 0 : index
    %c0_7 = arith.constant 0 : index
    %9 = vector.load %arg4[%c0_6, %c0_7] : memref<16x128xbf16, #tpu.memory_space<vmem>>, vector<16x128xbf16>
    tpu.vector_store %arg4[%c0_6, %c0_7], %8 {strides = array<i32>} : memref<16x128xbf16, #tpu.memory_space<vmem>>, vector<16x128xbf16>,
    return
  }
  func.func @transform_0(%arg0: i32) -> (i32, i32) {
    %c0_i32 = arith.constant 0 : i32
    %c0_i32_0 = arith.constant 0 : i32
    return %arg0, %c0_i32 : i32, i32
  }
  func.func @transform_1(%arg0: i32) -> (i32, i32) {
    %c0_i32 = arith.constant 0 : i32
    %c0_i32_0 = arith.constant 0 : i32
    %c0_i32_1 = arith.constant 0 : i32
    return %c0_i32, %c0_i32_0 : i32, i32
  }
  func.func @transform_2(%arg0: i32) -> (i32, i32) {
    %c0_i32 = arith.constant 0 : i32
    %c0_i32_0 = arith.constant 0 : i32
    %c0_i32_1 = arith.constant 0 : i32
    return %c0_i32, %c0_i32_0 : i32, i32
  }
  func.func @transform_3(%arg0: i32) -> (i32, i32) {
    %c0_i32 = arith.constant 0 : i32
    %c0_i32_0 = arith.constant 0 : i32
    return %arg0, %c0_i32 : i32, i32
  }
}

module attributes {stable_mosaic.version = 11 : i64} {
  func.func @_matmul_bias_act_kernel(%arg0: i32, %arg1: memref<32x128xbf16, #tpu.memory_space<vmem>>, %arg2: memref<128x64xbf16, #tpu.memory_space<vmem>>, %arg3: memref<1x64xf32, #tpu.memory_space<vmem>>, %arg4: memref<32x64xbf16, #tpu.memory_space<vmem>>) attributes {dimension_semantics = [#tpu.dimension_semantics<parallel>], iteration_bounds = array<i64: 1>, scalar_prefetch = 0 : i64, scratch_operands = 0 : i64, tpu.core_type = #tpu.core_type<tc>, window_params = [{transform_indices = @transform_0, window_bounds = array<i64: 32, 128>}, {pipeline_mode = #tpu.pipeline_mode<synchronous>, transform_indices = @transform_1, window_bounds = array<i64: 128, 64>}, {pipeline_mode = #tpu.pipeline_mode<synchronous>, transform_indices = @transform_2, window_bounds = array<i64: 1, 64>}, {transform_indices = @transform_3, window_bounds = array<i64: 32, 64>}]} {
    %c0 = arith.constant 0 : index
    %c0_0 = arith.constant 0 : index
    %0 = vector.load %arg1[%c0, %c0_0] : memref<32x128xbf16, #tpu.memory_space<vmem>>, vector<32x128xbf16>
    %c0_1 = arith.constant 0 : index
    %c0_2 = arith.constant 0 : index
    %1 = vector.load %arg2[%c0_1, %c0_2] : memref<128x64xbf16, #tpu.memory_space<vmem>>, vector<128x64xbf16>
    %cst = arith.constant dense<0.000000e+00> : vector<32x64xf32>
    %2 = tpu.matmul %0, %1, %cst {dimension_numbers = #tpu.dot_dimension_numbers<[1], [0], [0], [1], [0, 0, 1, 1], [], []>} : vector<32x128xbf16>, vector<128x64xbf16>, vector<32x64xf32> -> vector<32x64xf32>
    %c0_3 = arith.constant 0 : index
    %c0_4 = arith.constant 0 : index
    %3 = vector.load %arg3[%c0_3, %c0_4] : memref<1x64xf32, #tpu.memory_space<vmem>>, vector<1x64xf32>
    %4 = vector.broadcast %3 : vector<1x64xf32> to vector<32x64xf32>
    %5 = arith.addf %2, %4 : vector<32x64xf32>
    %cst_5 = arith.constant 0.000000e+00 : f32
    %6 = vector.broadcast %cst_5 : f32 to vector<32x64xf32>
    %7 = arith.maximumf %5, %6 : vector<32x64xf32>
    %8 = arith.truncf %7 : vector<32x64xf32> to vector<32x64xbf16>
    %c0_6 = arith.constant 0 : index
    %c0_7 = arith.constant 0 : index
    %9 = vector.load %arg4[%c0_6, %c0_7] : memref<32x64xbf16, #tpu.memory_space<vmem>>, vector<32x64xbf16>
    tpu.vector_store %arg4[%c0_6, %c0_7], %8 {strides = array<i32>} : memref<32x64xbf16, #tpu.memory_space<vmem>>, vector<32x64xbf16>,
    return
  }
  func.func @transform_0(%arg0: i32) -> (i32, i32) {
    %c0_i32 = arith.constant 0 : i32
    %c0_i32_0 = arith.constant 0 : i32
    return %arg0, %c0_i32 : i32, i32
  }
  func.func @transform_1(%arg0: i32) -> (i32, i32) {
    %c0_i32 = arith.constant 0 : i32
    %c0_i32_0 = arith.constant 0 : i32
    %c0_i32_1 = arith.constant 0 : i32
    return %c0_i32, %c0_i32_0 : i32, i32
  }
  func.func @transform_2(%arg0: i32) -> (i32, i32) {
    %c0_i32 = arith.constant 0 : i32
    %c0_i32_0 = arith.constant 0 : i32
    %c0_i32_1 = arith.constant 0 : i32
    return %c0_i32, %c0_i32_0 : i32, i32
  }
  func.func @transform_3(%arg0: i32) -> (i32, i32) {
    %c0_i32 = arith.constant 0 : i32
    %c0_i32_0 = arith.constant 0 : i32
    return %arg0, %c0_i32 : i32, i32
  }
}

module attributes {stable_mosaic.version = 11 : i64} {
  func.func @_matmul_bias_act_kernel(%arg0: i32, %arg1: memref<128x64xbf16, #tpu.memory_space<vmem>>, %arg2: memref<64x4xbf16, #tpu.memory_space<vmem>>, %arg3: memref<1x4xf32, #tpu.memory_space<vmem>>, %arg4: memref<128x4xf32, #tpu.memory_space<vmem>>) attributes {dimension_semantics = [#tpu.dimension_semantics<parallel>], iteration_bounds = array<i64: 1>, scalar_prefetch = 0 : i64, scratch_operands = 0 : i64, tpu.core_type = #tpu.core_type<tc>, window_params = [{transform_indices = @transform_0, window_bounds = array<i64: 128, 64>}, {pipeline_mode = #tpu.pipeline_mode<synchronous>, transform_indices = @transform_1, window_bounds = array<i64: 64, 4>}, {pipeline_mode = #tpu.pipeline_mode<synchronous>, transform_indices = @transform_2, window_bounds = array<i64: 1, 4>}, {transform_indices = @transform_3, window_bounds = array<i64: 128, 4>}]} {
    %c0 = arith.constant 0 : index
    %c0_0 = arith.constant 0 : index
    %0 = vector.load %arg1[%c0, %c0_0] : memref<128x64xbf16, #tpu.memory_space<vmem>>, vector<128x64xbf16>
    %c0_1 = arith.constant 0 : index
    %c0_2 = arith.constant 0 : index
    %1 = vector.load %arg2[%c0_1, %c0_2] : memref<64x4xbf16, #tpu.memory_space<vmem>>, vector<64x4xbf16>
    %cst = arith.constant dense<0.000000e+00> : vector<128x4xf32>
    %2 = tpu.matmul %0, %1, %cst {dimension_numbers = #tpu.dot_dimension_numbers<[1], [0], [0], [1], [0, 0, 1, 1], [], []>} : vector<128x64xbf16>, vector<64x4xbf16>, vector<128x4xf32> -> vector<128x4xf32>
    %c0_3 = arith.constant 0 : index
    %c0_4 = arith.constant 0 : index
    %3 = vector.load %arg3[%c0_3, %c0_4] : memref<1x4xf32, #tpu.memory_space<vmem>>, vector<1x4xf32>
    %4 = vector.broadcast %3 : vector<1x4xf32> to vector<128x4xf32>
    %5 = arith.addf %2, %4 : vector<128x4xf32>
    %cst_5 = arith.constant 0.000000e+00 : f32
    %6 = vector.broadcast %cst_5 : f32 to vector<128x4xf32>
    %7 = arith.subf %6, %5 : vector<128x4xf32>
    %8 = math.exp %7 : vector<128x4xf32>
    %cst_6 = arith.constant 1.000000e+00 : f32
    %9 = vector.broadcast %cst_6 : f32 to vector<128x4xf32>
    %10 = arith.addf %9, %8 : vector<128x4xf32>
    %11 = tpu.reciprocal %10 : vector<128x4xf32> -> vector<128x4xf32>
    %c0_7 = arith.constant 0 : index
    %c0_8 = arith.constant 0 : index
    %12 = vector.load %arg4[%c0_7, %c0_8] : memref<128x4xf32, #tpu.memory_space<vmem>>, vector<128x4xf32>
    tpu.vector_store %arg4[%c0_7, %c0_8], %11 {strides = array<i32>} : memref<128x4xf32, #tpu.memory_space<vmem>>, vector<128x4xf32>,
    return
  }
  func.func @transform_0(%arg0: i32) -> (i32, i32) {
    %c0_i32 = arith.constant 0 : i32
    %c0_i32_0 = arith.constant 0 : i32
    return %arg0, %c0_i32 : i32, i32
  }
  func.func @transform_1(%arg0: i32) -> (i32, i32) {
    %c0_i32 = arith.constant 0 : i32
    %c0_i32_0 = arith.constant 0 : i32
    %c0_i32_1 = arith.constant 0 : i32
    return %c0_i32, %c0_i32_0 : i32, i32
  }
  func.func @transform_2(%arg0: i32) -> (i32, i32) {
    %c0_i32 = arith.constant 0 : i32
    %c0_i32_0 = arith.constant 0 : i32
    %c0_i32_1 = arith.constant 0 : i32
    return %c0_i32, %c0_i32_0 : i32, i32
  }
  func.func @transform_3(%arg0: i32) -> (i32, i32) {
    %c0_i32 = arith.constant 0 : i32
    %c0_i32_0 = arith.constant 0 : i32
    return %arg0, %c0_i32 : i32, i32
  }
}

</mosaic_0001>

<llo_original>
// kernel: pneumonia_autoencoder_forward.6
$region0: #{pneumonia_autoencoder_forward.6}
  #allocation0 [shape = 'u32[]', space=smem, size = 0x4, offset = 0x4, fixed_abs, tag = 'smem constant byte address 0x4 - core index']
  #allocation1 [shape = 'u32[144,128]{1,0:T(1,128)}', space=vmem, size = 0x12000, scoped, tag = 'internal scratch']
  %s0 = inlined_call_operand.vmem [shape: bf16[128,9], index: 0, kind: input, shape index: {}]
  %s1 = inlined_call_operand.vmem [shape: bf16[9,16], index: 1, kind: input, shape index: {}]
  %s2 = inlined_call_operand.vmem [shape: f32[1,16], index: 2, kind: input, shape index: {}]
  %s3 = inlined_call_operand.vmem [shape: bf16[128,16], index: 3, kind: output, shape index: {}]
  %s4 = sld [smem:[#allocation0]]
  $region22: #{pneumonia_autoencoder_forward.6} parent=0
    _
  %s6 = ssub.s32 1, %s4
  %s7 = scalar_select 0, %s6, %s4
  // Predicated region
  $region2: #{pneumonia_autoencoder_forward.6} parent=0 // pred_check
    _
  $region3: #{pneumonia_autoencoder_forward.6} parent=0 // pred_check_branch
    %9 = sbr.rel (0) target = $region5
  $region4: #{pneumonia_autoencoder_forward.6} parent=0 // pred_region
    _
  $region5: #{pneumonia_autoencoder_forward.6} parent=0 // pred_fallthru
    _
  // Predicated region
  $region6: #{pneumonia_autoencoder_forward.6} parent=0 // pred_check
    _
  $region7: #{pneumonia_autoencoder_forward.6} parent=0 // pred_check_branch
    %11 = sbr.rel (0) target = $region9
  $region8: #{pneumonia_autoencoder_forward.6} parent=0 // pred_region
    _
  $region9: #{pneumonia_autoencoder_forward.6} parent=0 // pred_fallthru
    _
  // Predicated region
  $region10: #{pneumonia_autoencoder_forward.6} parent=0 // pred_check
    _
  $region11: #{pneumonia_autoencoder_forward.6} parent=0 // pred_check_branch
    %13 = sbr.rel (0) target = $region13
  $region12: #{pneumonia_autoencoder_forward.6} parent=0 // pred_region
    _
  $region13: #{pneumonia_autoencoder_forward.6} parent=0 // pred_fallthru
    _
  %v15 = vld [vmem:[%s0] sm:$0xf]
  %v16 = vld [vmem:[%s0 + $0x4] sm:$0xf]
  %v17 = vld [vmem:[%s0 + $0x8] sm:$0xf]
  %v18 = vld [vmem:[%s0 + $0xc] sm:$0xf]
  %v19 = vld [vmem:[%s0 + $0x10] sm:$0xf]
  %v20 = vld [vmem:[%s0 + $0x14] sm:$0xf]
  %v21 = vld [vmem:[%s0 + $0x18] sm:$0xf]
  %v22 = vld [vmem:[%s0 + $0x1c] sm:$0xf]
  %v23 = vld [vmem:[%s0 + $0x20] sm:$0xf]
  %v24 = vld [vmem:[%s0 + $0x24] sm:$0xf]
  %v25 = vld [vmem:[%s0 + $0x28] sm:$0xf]
  %v26 = vld [vmem:[%s0 + $0x2c] sm:$0xf]
  %v27 = vld [vmem:[%s0 + $0x30] sm:$0xf]
  %v28 = vld [vmem:[%s0 + $0x34] sm:$0xf]
  %v29 = vld [vmem:[%s0 + $0x38] sm:$0xf]
  %v30 = vld [vmem:[%s0 + $0x3c] sm:$0xf]
  %v31 = vld [vmem:[%s1] sm:$0xf]
  %v32 = vld [vmem:[%s1 + $0x4] sm:$0x1]
  %v33 = vld [vmem:[%s2] sm:$0x1]
  %v35 = vlaneseq
  %v36 = vshrl.u32 %v35, 7
  %v37 = vsub.s32 0, %v36
  %v38 = vrot.slane %v33, %v37
  %v56 = vunpack.c.l.b16 %v15
  %v57 = vunpack.c.l.b16 %v16
  %v58 = vunpack.c.l.b16 %v17
  %v59 = vunpack.c.l.b16 %v18
  %v60 = vunpack.c.l.b16 %v19
  %v61 = vunpack.c.l.b16 %v20
  %v62 = vunpack.c.l.b16 %v21
  %v63 = vunpack.c.l.b16 %v22
  %v64 = vunpack.c.l.b16 %v23
  %v65 = vunpack.c.l.b16 %v24
  %v66 = vunpack.c.l.b16 %v25
  %v67 = vunpack.c.l.b16 %v26
  %v68 = vunpack.c.l.b16 %v27
  %v69 = vunpack.c.l.b16 %v28
  %v70 = vunpack.c.l.b16 %v29
  %v71 = vunpack.c.l.b16 %v30
  %v72 = vpack.c.b16 %v57, %v56
  %v73 = vpack.c.b16 %v59, %v58
  %v74 = vpack.c.b16 %v61, %v60
  %v75 = vpack.c.b16 %v63, %v62
  %v76 = vpack.c.b16 %v65, %v64
  %v77 = vpack.c.b16 %v67, %v66
  %v78 = vpack.c.b16 %v69, %v68
  %v79 = vpack.c.b16 %v71, %v70
  %v82 = vunpack.c.l.b16 %v31
  %v83 = vunpack.c.l.b16 %v32
  %v84 = vpack.c.b16 %v83, %v82
  %vm85 = vcmask 72704
  %v87 = vsel %vm85, %v72, 0
  %v90 = vsel %vm85, %v73, 0
  %v93 = vsel %vm85, %v74, 0
  %v96 = vsel %vm85, %v75, 0
  %v99 = vsel %vm85, %v76, 0
  %v102 = vsel %vm85, %v77, 0
  %v105 = vsel %vm85, %v78, 0
  %v108 = vsel %vm85, %v79, 0
  %vm110 = vcmask 1043456
  %vm111 = vcmask 1044480
  %v112 = vsel %vm110, 4294967295, 65535
  %v113 = vsel %vm111, %v112, 0
  %v115 = vand.u32 %v84, %v113
  %117 = vmatprep.subr.bf16.mxu0 0
  %118 = vmatpush1.bf16.msra.mxu0 0
  %119 = vmatprep.subr.bf16.mxu0 0
  %120 = vmatpush1.bf16.msra.mxu0 0
  %121 = vmatprep.subr.bf16.mxu0 0
  %122 = vmatpush1.bf16.msra.mxu0 0
  %123 = vmatprep.subr.bf16.mxu0 0
  %124 = vmatpush1.bf16.msra.mxu0 0
  %125 = vmatprep.subr.bf16.mxu0 0
  %126 = vmatpush1.bf16.msra.mxu0 0
  %127 = vmatprep.subr.bf16.mxu0 0
  %128 = vmatpush1.bf16.msra.mxu0 0
  %129 = vmatprep.subr.bf16.mxu0 0
  %130 = vmatpush1.bf16.msra.mxu0 0
  %131 = vmatprep.subr.bf16.mxu0 0
  %132 = vmatpush1.bf16.msra.mxu0 %v115
  %133 = vmatprep.subr.bf16.mxu0 0
  %134 = vmatpush2.bf16.msra.mxu0 0
  %135 = vmatprep.subr.bf16.mxu0 0
  %136 = vmatpush2.bf16.msra.mxu0 0
  %137 = vmatprep.subr.bf16.mxu0 0
  %138 = vmatpush2.bf16.msra.mxu0 0
  %139 = vmatprep.subr.bf16.mxu0 0
  %140 = vmatpush2.bf16.msra.mxu0 0
  %141 = vmatprep.subr.bf16.mxu0 0
  %142 = vmatpush2.bf16.msra.mxu0 0
  %143 = vmatprep.subr.bf16.mxu0 0
  %144 = vmatpush2.bf16.msra.mxu0 0
  %145 = vmatprep.subr.bf16.mxu0 0
  %146 = vmatpush2.bf16.msra.mxu0 0
  %147 = vmatprep.subr.bf16.mxu0 0
  %148 = vmatpush2.bf16.msra.mxu0 0
  %149 = vmatprep.mubr.bf16.mxu0 0
  %150 = vmatmul.mubr.bf16.gmra.mxu0 %v87
  %v151 = vpop.f32.mrf.mxu0
  %v152 = vadd.f32 %v38, %v151
  %v153 = vpop.f32.mrf.mxu0
  %v154 = vpop.f32.mrf.mxu0
  %v155 = vadd.f32 %v38, %v154
  %v156 = vpop.f32.mrf.mxu0
  %157 = vmatprep.mubr.bf16.mxu0 0
  %158 = vmatmul.mubr.bf16.gmra.mxu0 %v90
  %v159 = vpop.f32.mrf.mxu0
  %v160 = vadd.f32 %v38, %v159
  %v161 = vpop.f32.mrf.mxu0
  %v162 = vpop.f32.mrf.mxu0
  %v163 = vadd.f32 %v38, %v162
  %v164 = vpop.f32.mrf.mxu0
  %165 = vmatprep.mubr.bf16.mxu0 0
  %166 = vmatmul.mubr.bf16.gmra.mxu0 %v93
  %v167 = vpop.f32.mrf.mxu0
  %v168 = vadd.f32 %v38, %v167
  %v169 = vpop.f32.mrf.mxu0
  %v170 = vpop.f32.mrf.mxu0
  %v171 = vadd.f32 %v38, %v170
  %v172 = vpop.f32.mrf.mxu0
  %173 = vmatprep.mubr.bf16.mxu0 0
  %174 = vmatmul.mubr.bf16.gmra.mxu0 %v96
  %v175 = vpop.f32.mrf.mxu0
  %v176 = vadd.f32 %v38, %v175
  %v177 = vpop.f32.mrf.mxu0
  %v178 = vpop.f32.mrf.mxu0
  %v179 = vadd.f32 %v38, %v178
  %v180 = vpop.f32.mrf.mxu0
  %181 = vmatprep.mubr.bf16.mxu0 0
  %182 = vmatmul.mubr.bf16.gmra.mxu0 %v99
  %v183 = vpop.f32.mrf.mxu0
  %v184 = vadd.f32 %v38, %v183
  %v185 = vpop.f32.mrf.mxu0
  %v186 = vpop.f32.mrf.mxu0
  %v187 = vadd.f32 %v38, %v186
  %v188 = vpop.f32.mrf.mxu0
  %189 = vmatprep.mubr.bf16.mxu0 0
  %190 = vmatmul.mubr.bf16.gmra.mxu0 %v102
  %v191 = vpop.f32.mrf.mxu0
  %v192 = vadd.f32 %v38, %v191
  %v193 = vpop.f32.mrf.mxu0
  %v194 = vpop.f32.mrf.mxu0
  %v195 = vadd.f32 %v38, %v194
  %v196 = vpop.f32.mrf.mxu0
  %197 = vmatprep.mubr.bf16.mxu0 0
  %198 = vmatmul.mubr.bf16.gmra.mxu0 %v105
  %v199 = vpop.f32.mrf.mxu0
  %v200 = vadd.f32 %v38, %v199
  %v201 = vpop.f32.mrf.mxu0
  %v202 = vpop.f32.mrf.mxu0
  %v203 = vadd.f32 %v38, %v202
  %v204 = vpop.f32.mrf.mxu0
  %205 = vmatprep.mubr.bf16.mxu0 0
  %206 = vmatmul.mubr.bf16.gmra.mxu0 %v108
  %v207 = vpop.f32.mrf.mxu0
  %v208 = vadd.f32 %v38, %v207
  %v209 = vpop.f32.mrf.mxu0
  %v210 = vpop.f32.mrf.mxu0
  %v211 = vadd.f32 %v38, %v210
  %v212 = vpop.f32.mrf.mxu0
  %213 = vdwg.mxu0
  %v214 = vmax.f32 %v152, 0.0
  %v215 = vmax.f32 %v155, 0.0
  %v216 = vmax.f32 %v160, 0.0
  %v217 = vmax.f32 %v163, 0.0
  %v218 = vmax.f32 %v168, 0.0
  %v219 = vmax.f32 %v171, 0.0
  %v220 = vmax.f32 %v176, 0.0
  %v221 = vmax.f32 %v179, 0.0
  %v222 = vmax.f32 %v184, 0.0
  %v223 = vmax.f32 %v187, 0.0
  %v224 = vmax.f32 %v192, 0.0
  %v225 = vmax.f32 %v195, 0.0
  %v226 = vmax.f32 %v200, 0.0
  %v227 = vmax.f32 %v203, 0.0
  %v228 = vmax.f32 %v208, 0.0
  %v229 = vmax.f32 %v211, 0.0
  %v230 = vpack.c.bf16 %v215, %v214
  %v231 = vpack.c.bf16 %v217, %v216
  %v232 = vpack.c.bf16 %v219, %v218
  %v233 = vpack.c.bf16 %v221, %v220
  %v234 = vpack.c.bf16 %v223, %v222
  %v235 = vpack.c.bf16 %v225, %v224
  %v236 = vpack.c.bf16 %v227, %v226
  %v237 = vpack.c.bf16 %v229, %v228
  %v246 = vunpack.c.l.b16 %v230
  %v247 = vunpack.c.h.b16 %v230
  %v248 = vunpack.c.l.b16 %v231
  %v249 = vunpack.c.h.b16 %v231
  %v250 = vunpack.c.l.b16 %v232
  %v251 = vunpack.c.h.b16 %v232
  %v252 = vunpack.c.l.b16 %v233
  %v253 = vunpack.c.h.b16 %v233
  %v254 = vunpack.c.l.b16 %v234
  %v255 = vunpack.c.h.b16 %v234
  %v256 = vunpack.c.l.b16 %v235
  %v257 = vunpack.c.h.b16 %v235
  %v258 = vunpack.c.l.b16 %v236
  %v259 = vunpack.c.h.b16 %v236
  %v260 = vunpack.c.l.b16 %v237
  %v261 = vunpack.c.h.b16 %v237
  %v262 = vpack.c.b16 %v246, %v246
  %v263 = vpack.c.b16 %v247, %v247
  %v264 = vpack.c.b16 %v248, %v248
  %v265 = vpack.c.b16 %v249, %v249
  %v266 = vpack.c.b16 %v250, %v250
  %v267 = vpack.c.b16 %v251, %v251
  %v268 = vpack.c.b16 %v252, %v252
  %v269 = vpack.c.b16 %v253, %v253
  %v270 = vpack.c.b16 %v254, %v254
  %v271 = vpack.c.b16 %v255, %v255
  %v272 = vpack.c.b16 %v256, %v256
  %v273 = vpack.c.b16 %v257, %v257
  %v274 = vpack.c.b16 %v258, %v258
  %v275 = vpack.c.b16 %v259, %v259
  %v276 = vpack.c.b16 %v260, %v260
  %v277 = vpack.c.b16 %v261, %v261
  %vm294 = vcmask 125952
  %295 = vst.msk [vmem:[%s3] sm:$0xf] %vm294, %v262
  %296 = vst.msk [vmem:[%s3 + $0x4] sm:$0xf] %vm294, %v263
  %297 = vst.msk [vmem:[%s3 + $0x8] sm:$0xf] %vm294, %v264
  %298 = vst.msk [vmem:[%s3 + $0xc] sm:$0xf] %vm294, %v265
  %299 = vst.msk [vmem:[%s3 + $0x10] sm:$0xf] %vm294, %v266
  %300 = vst.msk [vmem:[%s3 + $0x14] sm:$0xf] %vm294, %v267
  %301 = vst.msk [vmem:[%s3 + $0x18] sm:$0xf] %vm294, %v268
  %302 = vst.msk [vmem:[%s3 + $0x1c] sm:$0xf] %vm294, %v269
  %303 = vst.msk [vmem:[%s3 + $0x20] sm:$0xf] %vm294, %v270
  %304 = vst.msk [vmem:[%s3 + $0x24] sm:$0xf] %vm294, %v271
  %305 = vst.msk [vmem:[%s3 + $0x28] sm:$0xf] %vm294, %v272
  %306 = vst.msk [vmem:[%s3 + $0x2c] sm:$0xf] %vm294, %v273
  %307 = vst.msk [vmem:[%s3 + $0x30] sm:$0xf] %vm294, %v274
  %308 = vst.msk [vmem:[%s3 + $0x34] sm:$0xf] %vm294, %v275
  %309 = vst.msk [vmem:[%s3 + $0x38] sm:$0xf] %vm294, %v276
  %310 = vst.msk [vmem:[%s3 + $0x3c] sm:$0xf] %vm294, %v277
  // Predicated region
  $region14: #{pneumonia_autoencoder_forward.6} parent=0 // pred_check
    _
  $region15: #{pneumonia_autoencoder_forward.6} parent=0 // pred_check_branch
    %312 = sbr.rel (0) target = $region17
  $region16: #{pneumonia_autoencoder_forward.6} parent=0 // pred_region
    _
  $region17: #{pneumonia_autoencoder_forward.6} parent=0 // pred_fallthru
    _
  // Predicated region
  $region18: #{pneumonia_autoencoder_forward.6} parent=0 // pred_check
    _
  $region19: #{pneumonia_autoencoder_forward.6} parent=0 // pred_check_branch
    %314 = sbr.rel (0) target = $region21
  $region20: #{pneumonia_autoencoder_forward.6} parent=0 // pred_region
    _
  $region21: #{pneumonia_autoencoder_forward.6} parent=0 // pred_fallthru
    _

// kernel: pneumonia_autoencoder_forward.7
$region0: #{pneumonia_autoencoder_forward.7}
  #allocation0 [shape = 'u32[]', space=smem, size = 0x4, offset = 0x4, fixed_abs, tag = 'smem constant byte address 0x4 - core index']
  #allocation1 [shape = 'u32[144,128]{1,0:T(1,128)}', space=vmem, size = 0x12000, scoped, tag = 'internal scratch']
  %s0 = inlined_call_operand.vmem [shape: bf16[32,144], index: 0, kind: input, shape index: {}]
  %s1 = inlined_call_operand.vmem [shape: bf16[144,32], index: 1, kind: input, shape index: {}]
  %s2 = inlined_call_operand.vmem [shape: f32[1,32], index: 2, kind: input, shape index: {}]
  %s3 = inlined_call_operand.vmem [shape: bf16[32,32], index: 3, kind: output, shape index: {}]
  %s4 = sld [smem:[#allocation0]]
  $region22: #{pneumonia_autoencoder_forward.7} parent=0
    _
  %s6 = ssub.s32 1, %s4
  %s7 = scalar_select 0, %s6, %s4
  // Predicated region
  $region2: #{pneumonia_autoencoder_forward.7} parent=0 // pred_check
    _
  $region3: #{pneumonia_autoencoder_forward.7} parent=0 // pred_check_branch
    %9 = sbr.rel (0) target = $region5
  $region4: #{pneumonia_autoencoder_forward.7} parent=0 // pred_region
    _
  $region5: #{pneumonia_autoencoder_forward.7} parent=0 // pred_fallthru
    _
  // Predicated region
  $region6: #{pneumonia_autoencoder_forward.7} parent=0 // pred_check
    _
  $region7: #{pneumonia_autoencoder_forward.7} parent=0 // pred_check_branch
    %11 = sbr.rel (0) target = $region9
  $region8: #{pneumonia_autoencoder_forward.7} parent=0 // pred_region
    _
  $region9: #{pneumonia_autoencoder_forward.7} parent=0 // pred_fallthru
    _
  // Predicated region
  $region10: #{pneumonia_autoencoder_forward.7} parent=0 // pred_check
    _
  $region11: #{pneumonia_autoencoder_forward.7} parent=0 // pred_check_branch
    %13 = sbr.rel (0) target = $region13
  $region12: #{pneumonia_autoencoder_forward.7} parent=0 // pred_region
    _
  $region13: #{pneumonia_autoencoder_forward.7} parent=0 // pred_fallthru
    _
  %v15 = vld [vmem:[%s0] sm:$0xff]
  %v16 = vld [vmem:[%s0 + $0x8] sm:$0xff]
  %v17 = vld [vmem:[%s0 + $0x10] sm:$0xff]
  %v18 = vld [vmem:[%s0 + $0x18] sm:$0xff]
  %v19 = vld [vmem:[%s1] sm:$0xf]
  %v20 = vld [vmem:[%s1 + $0x4] sm:$0xf]
  %v21 = vld [vmem:[%s1 + $0x8] sm:$0xf]
  %v22 = vld [vmem:[%s1 + $0xc] sm:$0xf]
  %v23 = vld [vmem:[%s1 + $0x10] sm:$0xf]
  %v24 = vld [vmem:[%s1 + $0x14] sm:$0xf]
  %v25 = vld [vmem:[%s1 + $0x18] sm:$0xf]
  %v26 = vld [vmem:[%s1 + $0x1c] sm:$0xf]
  %v27 = vld [vmem:[%s1 + $0x20] sm:$0xf]
  %v28 = vld [vmem:[%s1 + $0x24] sm:$0xf]
  %v29 = vld [vmem:[%s1 + $0x28] sm:$0xf]
  %v30 = vld [vmem:[%s1 + $0x2c] sm:$0xf]
  %v31 = vld [vmem:[%s1 + $0x30] sm:$0xf]
  %v32 = vld [vmem:[%s1 + $0x34] sm:$0xf]
  %v33 = vld [vmem:[%s1 + $0x38] sm:$0xf]
  %v34 = vld [vmem:[%s1 + $0x3c] sm:$0xf]
  %v35 = vld [vmem:[%s1 + $0x40] sm:$0xf]
  %v36 = vld [vmem:[%s1 + $0x44] sm:$0xf]
  %v37 = vld [vmem:[%s2] sm:$0x1]
  %v39 = vlaneseq
  %v40 = vshrl.u32 %v39, 7
  %v41 = vsub.s32 0, %v40
  %v42 = vrot.slane %v37, %v41
  %v48 = vunpack.c.l.b16 %v15
  %v49 = vunpack.c.h.b16 %v15
  %v50 = vunpack.c.l.b16 %v16
  %v51 = vunpack.c.h.b16 %v16
  %v52 = vunpack.c.l.b16 %v17
  %v53 = vunpack.c.h.b16 %v17
  %v54 = vunpack.c.l.b16 %v18
  %v55 = vunpack.c.h.b16 %v18
  %v56 = vpack.c.b16 %v50, %v48
  %v57 = vpack.c.b16 %v51, %v49
  %v58 = vpack.c.b16 %v54, %v52
  %v59 = vpack.c.b16 %v55, %v53
  %v80 = vunpack.c.l.b16 %v19
  %v81 = vunpack.c.l.b16 %v20
  %v82 = vunpack.c.l.b16 %v21
  %v83 = vunpack.c.l.b16 %v22
  %v84 = vunpack.c.l.b16 %v23
  %v85 = vunpack.c.l.b16 %v24
  %v86 = vunpack.c.l.b16 %v25
  %v87 = vunpack.c.l.b16 %v26
  %v88 = vunpack.c.l.b16 %v27
  %v89 = vunpack.c.l.b16 %v28
  %v90 = vunpack.c.l.b16 %v29
  %v91 = vunpack.c.l.b16 %v30
  %v92 = vunpack.c.l.b16 %v31
  %v93 = vunpack.c.l.b16 %v32
  %v94 = vunpack.c.l.b16 %v33
  %v95 = vunpack.c.l.b16 %v34
  %v96 = vunpack.c.l.b16 %v35
  %v97 = vunpack.c.l.b16 %v36
  %v98 = vpack.c.b16 %v81, %v80
  %v99 = vpack.c.b16 %v83, %v82
  %v100 = vpack.c.b16 %v85, %v84
  %v101 = vpack.c.b16 %v87, %v86
  %v102 = vpack.c.b16 %v89, %v88
  %v103 = vpack.c.b16 %v91, %v90
  %v104 = vpack.c.b16 %v93, %v92
  %v105 = vpack.c.b16 %v95, %v94
  %v106 = vpack.c.b16 %v97, %v96
  %vm116 = vcmask 130048
  %v118 = vsel %vm116, %v57, 0
  %v121 = vsel %vm116, %v59, 0
  %123 = vmatprep.subr.bf16.mxu0 0
  %124 = vmatpush1.bf16.msra.mxu0 %v105
  %125 = vmatprep.subr.bf16.mxu0 0
  %126 = vmatpush1.bf16.msra.mxu0 %v104
  %127 = vmatprep.subr.bf16.mxu0 0
  %128 = vmatpush1.bf16.msra.mxu0 %v103
  %129 = vmatprep.subr.bf16.mxu0 0
  %130 = vmatpush1.bf16.msra.mxu0 %v102
  %131 = vmatprep.subr.bf16.mxu0 0
  %132 = vmatpush1.bf16.msra.mxu0 %v101
  %133 = vmatprep.subr.bf16.mxu0 0
  %134 = vmatpush1.bf16.msra.mxu0 %v100
  %135 = vmatprep.subr.bf16.mxu0 0
  %136 = vmatpush1.bf16.msra.mxu0 %v99
  %137 = vmatprep.subr.bf16.mxu0 0
  %138 = vmatpush1.bf16.msra.mxu0 %v98
  %139 = vmatprep.subr.bf16.mxu0 0
  %140 = vmatpush2.bf16.msra.mxu0 0
  %141 = vmatprep.subr.bf16.mxu0 0
  %142 = vmatpush2.bf16.msra.mxu0 0
  %143 = vmatprep.subr.bf16.mxu0 0
  %144 = vmatpush2.bf16.msra.mxu0 0
  %145 = vmatprep.subr.bf16.mxu0 0
  %146 = vmatpush2.bf16.msra.mxu0 0
  %147 = vmatprep.subr.bf16.mxu0 0
  %148 = vmatpush2.bf16.msra.mxu0 0
  %149 = vmatprep.subr.bf16.mxu0 0
  %150 = vmatpush2.bf16.msra.mxu0 0
  %151 = vmatprep.subr.bf16.mxu0 0
  %152 = vmatpush2.bf16.msra.mxu0 0
  %153 = vmatprep.subr.bf16.mxu0 0
  %154 = vmatpush2.bf16.msra.mxu0 %v106
  %155 = vmatprep.mubr.bf16.mxu0 %v118
  %156 = vmatmul.mubr.bf16.gmra.mxu0 %v56
  %v157 = vpop.f32.mrf.mxu0
  %v158 = vadd.f32 %v42, %v157
  %v159 = vpop.f32.mrf.mxu0
  %v160 = vpop.f32.mrf.mxu0
  %v161 = vadd.f32 %v42, %v160
  %v162 = vpop.f32.mrf.mxu0
  %163 = vmatprep.mubr.bf16.mxu0 %v121
  %164 = vmatmul.mubr.bf16.gmra.mxu0 %v58
  %v165 = vpop.f32.mrf.mxu0
  %v166 = vadd.f32 %v42, %v165
  %v167 = vpop.f32.mrf.mxu0
  %v168 = vpop.f32.mrf.mxu0
  %v169 = vadd.f32 %v42, %v168
  %v170 = vpop.f32.mrf.mxu0
  %171 = vdwg.mxu0
  %v172 = vmax.f32 %v158, 0.0
  %v173 = vmax.f32 %v161, 0.0
  %v174 = vmax.f32 %v166, 0.0
  %v175 = vmax.f32 %v169, 0.0
  %v176 = vpack.c.bf16 %v173, %v172
  %v177 = vpack.c.bf16 %v175, %v174
  %v180 = vunpack.c.l.b16 %v176
  %v181 = vunpack.c.h.b16 %v176
  %v182 = vunpack.c.l.b16 %v177
  %v183 = vunpack.c.h.b16 %v177
  %v184 = vpack.c.b16 %v180, %v180
  %v185 = vpack.c.b16 %v181, %v181
  %v186 = vpack.c.b16 %v182, %v182
  %v187 = vpack.c.b16 %v183, %v183
  %vm192 = vcmask 257024
  %193 = vst.msk [vmem:[%s3] sm:$0xf] %vm192, %v184
  %194 = vst.msk [vmem:[%s3 + $0x4] sm:$0xf] %vm192, %v185
  %195 = vst.msk [vmem:[%s3 + $0x8] sm:$0xf] %vm192, %v186
  %196 = vst.msk [vmem:[%s3 + $0xc] sm:$0xf] %vm192, %v187
  // Predicated region
  $region14: #{pneumonia_autoencoder_forward.7} parent=0 // pred_check
    _
  $region15: #{pneumonia_autoencoder_forward.7} parent=0 // pred_check_branch
    %198 = sbr.rel (0) target = $region17
  $region16: #{pneumonia_autoencoder_forward.7} parent=0 // pred_region
    _
  $region17: #{pneumonia_autoencoder_forward.7} parent=0 // pred_fallthru
    _
  // Predicated region
  $region18: #{pneumonia_autoencoder_forward.7} parent=0 // pred_check
    _
  $region19: #{pneumonia_autoencoder_forward.7} parent=0 // pred_check_branch
    %200 = sbr.rel (0) target = $region21
  $region20: #{pneumonia_autoencoder_forward.7} parent=0 // pred_region
    _
  $region21: #{pneumonia_autoencoder_forward.7} parent=0 // pred_fallthru
    _

// kernel: pneumonia_autoencoder_forward.8
$region0: #{pneumonia_autoencoder_forward.8}
  #allocation0 [shape = 'u32[]', space=smem, size = 0x4, offset = 0x4, fixed_abs, tag = 'smem constant byte address 0x4 - core index']
  #allocation1 [shape = 'u32[144,128]{1,0:T(1,128)}', space=vmem, size = 0x12000, scoped, tag = 'internal scratch']
  %s0 = inlined_call_operand.vmem [shape: bf16[16,288], index: 0, kind: input, shape index: {}]
  %s1 = inlined_call_operand.vmem [shape: bf16[288,64], index: 1, kind: input, shape index: {}]
  %s2 = inlined_call_operand.vmem [shape: f32[1,64], index: 2, kind: input, shape index: {}]
  %s3 = inlined_call_operand.vmem [shape: bf16[16,64], index: 3, kind: output, shape index: {}]
  %s4 = sld [smem:[#allocation0]]
  $region22: #{pneumonia_autoencoder_forward.8} parent=0
    _
  %s6 = ssub.s32 1, %s4
  %s7 = scalar_select 0, %s6, %s4
  // Predicated region
  $region2: #{pneumonia_autoencoder_forward.8} parent=0 // pred_check
    _
  $region3: #{pneumonia_autoencoder_forward.8} parent=0 // pred_check_branch
    %9 = sbr.rel (0) target = $region5
  $region4: #{pneumonia_autoencoder_forward.8} parent=0 // pred_region
    _
  $region5: #{pneumonia_autoencoder_forward.8} parent=0 // pred_fallthru
    _
  // Predicated region
  $region6: #{pneumonia_autoencoder_forward.8} parent=0 // pred_check
    _
  $region7: #{pneumonia_autoencoder_forward.8} parent=0 // pred_check_branch
    %11 = sbr.rel (0) target = $region9
  $region8: #{pneumonia_autoencoder_forward.8} parent=0 // pred_region
    _
  $region9: #{pneumonia_autoencoder_forward.8} parent=0 // pred_fallthru
    _
  // Predicated region
  $region10: #{pneumonia_autoencoder_forward.8} parent=0 // pred_check
    _
  $region11: #{pneumonia_autoencoder_forward.8} parent=0 // pred_check_branch
    %13 = sbr.rel (0) target = $region13
  $region12: #{pneumonia_autoencoder_forward.8} parent=0 // pred_region
    _
  $region13: #{pneumonia_autoencoder_forward.8} parent=0 // pred_fallthru
    _
  %v15 = vld [vmem:[%s0] sm:$0xff]
  %v16 = vld [vmem:[%s0 + $0x8] sm:$0xf]
  %v17 = vld [vmem:[%s0 + $0xc] sm:$0xff]
  %v18 = vld [vmem:[%s0 + $0x14] sm:$0xf]
  %v19 = vld [vmem:[%s1] sm:$0xf]
  %v20 = vld [vmem:[%s1 + $0x4] sm:$0xf]
  %v21 = vld [vmem:[%s1 + $0x8] sm:$0xf]
  %v22 = vld [vmem:[%s1 + $0xc] sm:$0xf]
  %v23 = vld [vmem:[%s1 + $0x10] sm:$0xf]
  %v24 = vld [vmem:[%s1 + $0x14] sm:$0xf]
  %v25 = vld [vmem:[%s1 + $0x18] sm:$0xf]
  %v26 = vld [vmem:[%s1 + $0x1c] sm:$0xf]
  %v27 = vld [vmem:[%s1 + $0x20] sm:$0xf]
  %v28 = vld [vmem:[%s1 + $0x24] sm:$0xf]
  %v29 = vld [vmem:[%s1 + $0x28] sm:$0xf]
  %v30 = vld [vmem:[%s1 + $0x2c] sm:$0xf]
  %v31 = vld [vmem:[%s1 + $0x30] sm:$0xf]
  %v32 = vld [vmem:[%s1 + $0x34] sm:$0xf]
  %v33 = vld [vmem:[%s1 + $0x38] sm:$0xf]
  %v34 = vld [vmem:[%s1 + $0x3c] sm:$0xf]
  %v35 = vld [vmem:[%s1 + $0x40] sm:$0xf]
  %v36 = vld [vmem:[%s1 + $0x44] sm:$0xf]
  %v37 = vld [vmem:[%s1 + $0x48] sm:$0xf]
  %v38 = vld [vmem:[%s1 + $0x4c] sm:$0xf]
  %v39 = vld [vmem:[%s1 + $0x50] sm:$0xf]
  %v40 = vld [vmem:[%s1 + $0x54] sm:$0xf]
  %v41 = vld [vmem:[%s1 + $0x58] sm:$0xf]
  %v42 = vld [vmem:[%s1 + $0x5c] sm:$0xf]
  %v43 = vld [vmem:[%s1 + $0x60] sm:$0xf]
  %v44 = vld [vmem:[%s1 + $0x64] sm:$0xf]
  %v45 = vld [vmem:[%s1 + $0x68] sm:$0xf]
  %v46 = vld [vmem:[%s1 + $0x6c] sm:$0xf]
  %v47 = vld [vmem:[%s1 + $0x70] sm:$0xf]
  %v48 = vld [vmem:[%s1 + $0x74] sm:$0xf]
  %v49 = vld [vmem:[%s1 + $0x78] sm:$0xf]
  %v50 = vld [vmem:[%s1 + $0x7c] sm:$0xf]
  %v51 = vld [vmem:[%s1 + $0x80] sm:$0xf]
  %v52 = vld [vmem:[%s1 + $0x84] sm:$0xf]
  %v53 = vld [vmem:[%s1 + $0x88] sm:$0xf]
  %v54 = vld [vmem:[%s1 + $0x8c] sm:$0xf]
  %v55 = vld [vmem:[%s2] sm:$0x1]
  %v57 = vlaneseq
  %v58 = vshrl.u32 %v57, 7
  %v59 = vsub.s32 0, %v58
  %v60 = vrot.slane %v55, %v59
  %v66 = vunpack.c.l.b16 %v15
  %v67 = vunpack.c.h.b16 %v15
  %v68 = vunpack.c.l.b16 %v16
  %v69 = vunpack.c.l.b16 %v17
  %v70 = vunpack.c.h.b16 %v17
  %v71 = vunpack.c.l.b16 %v18
  %v72 = vpack.c.b16 %v69, %v66
  %v73 = vpack.c.b16 %v70, %v67
  %v74 = vpack.c.b16 %v71, %v68
  %v113 = vunpack.c.l.b16 %v19
  %v114 = vunpack.c.l.b16 %v20
  %v115 = vunpack.c.l.b16 %v21
  %v116 = vunpack.c.l.b16 %v22
  %v117 = vunpack.c.l.b16 %v23
  %v118 = vunpack.c.l.b16 %v24
  %v119 = vunpack.c.l.b16 %v25
  %v120 = vunpack.c.l.b16 %v26
  %v121 = vunpack.c.l.b16 %v27
  %v122 = vunpack.c.l.b16 %v28
  %v123 = vunpack.c.l.b16 %v29
  %v124 = vunpack.c.l.b16 %v30
  %v125 = vunpack.c.l.b16 %v31
  %v126 = vunpack.c.l.b16 %v32
  %v127 = vunpack.c.l.b16 %v33
  %v128 = vunpack.c.l.b16 %v34
  %v129 = vunpack.c.l.b16 %v35
  %v130 = vunpack.c.l.b16 %v36
  %v131 = vunpack.c.l.b16 %v37
  %v132 = vunpack.c.l.b16 %v38
  %v133 = vunpack.c.l.b16 %v39
  %v134 = vunpack.c.l.b16 %v40
  %v135 = vunpack.c.l.b16 %v41
  %v136 = vunpack.c.l.b16 %v42
  %v137 = vunpack.c.l.b16 %v43
  %v138 = vunpack.c.l.b16 %v44
  %v139 = vunpack.c.l.b16 %v45
  %v140 = vunpack.c.l.b16 %v46
  %v141 = vunpack.c.l.b16 %v47
  %v142 = vunpack.c.l.b16 %v48
  %v143 = vunpack.c.l.b16 %v49
  %v144 = vunpack.c.l.b16 %v50
  %v145 = vunpack.c.l.b16 %v51
  %v146 = vunpack.c.l.b16 %v52
  %v147 = vunpack.c.l.b16 %v53
  %v148 = vunpack.c.l.b16 %v54
  %v149 = vpack.c.b16 %v114, %v113
  %v150 = vpack.c.b16 %v116, %v115
  %v151 = vpack.c.b16 %v118, %v117
  %v152 = vpack.c.b16 %v120, %v119
  %v153 = vpack.c.b16 %v122, %v121
  %v154 = vpack.c.b16 %v124, %v123
  %v155 = vpack.c.b16 %v126, %v125
  %v156 = vpack.c.b16 %v128, %v127
  %v157 = vpack.c.b16 %v130, %v129
  %v158 = vpack.c.b16 %v132, %v131
  %v159 = vpack.c.b16 %v134, %v133
  %v160 = vpack.c.b16 %v136, %v135
  %v161 = vpack.c.b16 %v138, %v137
  %v162 = vpack.c.b16 %v140, %v139
  %v163 = vpack.c.b16 %v142, %v141
  %v164 = vpack.c.b16 %v144, %v143
  %v165 = vpack.c.b16 %v146, %v145
  %v166 = vpack.c.b16 %v148, %v147
  %vm185 = vcmask 261120
  %v187 = vsel %vm185, %v74, 0
  %189 = vmatprep.subr.bf16.mxu0 0
  %190 = vmatpush1.bf16.msra.mxu0 %v156
  %191 = vmatprep.subr.bf16.mxu0 0
  %192 = vmatpush1.bf16.msra.mxu0 %v155
  %193 = vmatprep.subr.bf16.mxu0 0
  %194 = vmatpush1.bf16.msra.mxu0 %v154
  %195 = vmatprep.subr.bf16.mxu0 0
  %196 = vmatpush1.bf16.msra.mxu0 %v153
  %197 = vmatprep.subr.bf16.mxu0 0
  %198 = vmatpush1.bf16.msra.mxu0 %v152
  %199 = vmatprep.subr.bf16.mxu0 0
  %200 = vmatpush1.bf16.msra.mxu0 %v151
  %201 = vmatprep.subr.bf16.mxu0 0
  %202 = vmatpush1.bf16.msra.mxu0 %v150
  %203 = vmatprep.subr.bf16.mxu0 0
  %204 = vmatpush1.bf16.msra.mxu0 %v149
  %205 = vmatprep.subr.bf16.mxu0 0
  %206 = vmatpush2.bf16.msra.mxu0 %v164
  %207 = vmatprep.subr.bf16.mxu0 0
  %208 = vmatpush2.bf16.msra.mxu0 %v163
  %209 = vmatprep.subr.bf16.mxu0 0
  %210 = vmatpush2.bf16.msra.mxu0 %v162
  %211 = vmatprep.subr.bf16.mxu0 0
  %212 = vmatpush2.bf16.msra.mxu0 %v161
  %213 = vmatprep.subr.bf16.mxu0 0
  %214 = vmatpush2.bf16.msra.mxu0 %v160
  %215 = vmatprep.subr.bf16.mxu0 0
  %216 = vmatpush2.bf16.msra.mxu0 %v159
  %217 = vmatprep.subr.bf16.mxu0 0
  %218 = vmatpush2.bf16.msra.mxu0 %v158
  %219 = vmatprep.subr.bf16.mxu0 0
  %220 = vmatpush2.bf16.msra.mxu0 %v157
  %221 = vmatprep.mubr.bf16.mxu0 %v73
  %222 = vmatmul.mubr.bf16.gmra.mxu0 %v72
  %v223 = vpop.f32.mrf.mxu0
  %v224 = vadd.f32 %v60, %v223
  %v225 = vpop.f32.mrf.mxu0
  %v226 = vpop.f32.mrf.mxu0
  %v227 = vadd.f32 %v60, %v226
  %v228 = vpop.f32.mrf.mxu0
  %229 = vdwg.mxu0
  %230 = vmatprep.subr.bf16.mxu0 0
  %231 = vmatpush1.bf16.msra.mxu0 0
  %232 = vmatprep.subr.bf16.mxu0 0
  %233 = vmatpush1.bf16.msra.mxu0 0
  %234 = vmatprep.subr.bf16.mxu0 0
  %235 = vmatpush1.bf16.msra.mxu0 0
  %236 = vmatprep.subr.bf16.mxu0 0
  %237 = vmatpush1.bf16.msra.mxu0 0
  %238 = vmatprep.subr.bf16.mxu0 0
  %239 = vmatpush1.bf16.msra.mxu0 0
  %240 = vmatprep.subr.bf16.mxu0 0
  %241 = vmatpush1.bf16.msra.mxu0 0
  %242 = vmatprep.subr.bf16.mxu0 0
  %243 = vmatpush1.bf16.msra.mxu0 %v166
  %244 = vmatprep.subr.bf16.mxu0 0
  %245 = vmatpush1.bf16.msra.mxu0 %v165
  %246 = vmatprep.subr.bf16.mxu0 0
  %247 = vmatpush2.bf16.msra.mxu0 0
  %248 = vmatprep.subr.bf16.mxu0 0
  %249 = vmatpush2.bf16.msra.mxu0 0
  %250 = vmatprep.subr.bf16.mxu0 0
  %251 = vmatpush2.bf16.msra.mxu0 0
  %252 = vmatprep.subr.bf16.mxu0 0
  %253 = vmatpush2.bf16.msra.mxu0 0
  %254 = vmatprep.subr.bf16.mxu0 0
  %255 = vmatpush2.bf16.msra.mxu0 0
  %256 = vmatprep.subr.bf16.mxu0 0
  %257 = vmatpush2.bf16.msra.mxu0 0
  %258 = vmatprep.subr.bf16.mxu0 0
  %259 = vmatpush2.bf16.msra.mxu0 0
  %260 = vmatprep.subr.bf16.mxu0 0
  %261 = vmatpush2.bf16.msra.mxu0 0
  %262 = vmatprep.mubr.bf16.mxu0 0
  %263 = vmatmul.mubr.bf16.gmra.mxu0 %v187
  %v264 = vpop.f32.mrf.mxu0
  %v265 = vadd.f32 %v224, %v264
  %v266 = vpop.f32.mrf.mxu0
  %v267 = vpop.f32.mrf.mxu0
  %v268 = vadd.f32 %v227, %v267
  %v269 = vpop.f32.mrf.mxu0
  %270 = vdwg.mxu0
  %v271 = vmax.f32 %v265, 0.0
  %v272 = vmax.f32 %v268, 0.0
  %v273 = vpack.c.bf16 %v272, %v271
  %v275 = vunpack.c.l.b16 %v273
  %v276 = vunpack.c.h.b16 %v273
  %v277 = vpack.c.b16 %v275, %v275
  %v278 = vpack.c.b16 %v276, %v276
  %vm281 = vcmask 519168
  %282 = vst.msk [vmem:[%s3] sm:$0xf] %vm281, %v277
  %283 = vst.msk [vmem:[%s3 + $0x4] sm:$0xf] %vm281, %v278
  // Predicated region
  $region14: #{pneumonia_autoencoder_forward.8} parent=0 // pred_check
    _
  $region15: #{pneumonia_autoencoder_forward.8} parent=0 // pred_check_branch
    %285 = sbr.rel (0) target = $region17
  $region16: #{pneumonia_autoencoder_forward.8} parent=0 // pred_region
    _
  $region17: #{pneumonia_autoencoder_forward.8} parent=0 // pred_fallthru
    _
  // Predicated region
  $region18: #{pneumonia_autoencoder_forward.8} parent=0 // pred_check
    _
  $region19: #{pneumonia_autoencoder_forward.8} parent=0 // pred_check_branch
    %287 = sbr.rel (0) target = $region21
  $region20: #{pneumonia_autoencoder_forward.8} parent=0 // pred_region
    _
  $region21: #{pneumonia_autoencoder_forward.8} parent=0 // pred_fallthru
    _

// kernel: pneumonia_autoencoder_forward.10
$region0: #{pneumonia_autoencoder_forward.10}
  #allocation0 [shape = 'u32[]', space=smem, size = 0x4, offset = 0x4, fixed_abs, tag = 'smem constant byte address 0x4 - core index']
  #allocation1 [shape = 'u32[144,128]{1,0:T(1,128)}', space=vmem, size = 0x12000, scoped, tag = 'internal scratch']
  %s0 = inlined_call_operand.vmem [shape: bf16[32,128], index: 0, kind: input, shape index: {}]
  %s1 = inlined_call_operand.vmem [shape: bf16[128,64], index: 1, kind: input, shape index: {}]
  %s2 = inlined_call_operand.vmem [shape: f32[1,64], index: 2, kind: input, shape index: {}]
  %s3 = inlined_call_operand.vmem [shape: bf16[32,64], index: 3, kind: output, shape index: {}]
  %s4 = sld [smem:[#allocation0]]
  $region22: #{pneumonia_autoencoder_forward.10} parent=0
    _
  %s6 = ssub.s32 1, %s4
  %s7 = scalar_select 0, %s6, %s4
  // Predicated region
  $region2: #{pneumonia_autoencoder_forward.10} parent=0 // pred_check
    _
  $region3: #{pneumonia_autoencoder_forward.10} parent=0 // pred_check_branch
    %9 = sbr.rel (0) target = $region5
  $region4: #{pneumonia_autoencoder_forward.10} parent=0 // pred_region
    _
  $region5: #{pneumonia_autoencoder_forward.10} parent=0 // pred_fallthru
    _
  // Predicated region
  $region6: #{pneumonia_autoencoder_forward.10} parent=0 // pred_check
    _
  $region7: #{pneumonia_autoencoder_forward.10} parent=0 // pred_check_branch
    %11 = sbr.rel (0) target = $region9
  $region8: #{pneumonia_autoencoder_forward.10} parent=0 // pred_region
    _
  $region9: #{pneumonia_autoencoder_forward.10} parent=0 // pred_fallthru
    _
  // Predicated region
  $region10: #{pneumonia_autoencoder_forward.10} parent=0 // pred_check
    _
  $region11: #{pneumonia_autoencoder_forward.10} parent=0 // pred_check_branch
    %13 = sbr.rel (0) target = $region13
  $region12: #{pneumonia_autoencoder_forward.10} parent=0 // pred_region
    _
  $region13: #{pneumonia_autoencoder_forward.10} parent=0 // pred_fallthru
    _
  %v15 = vld [vmem:[%s0] sm:$0xf]
  %v16 = vld [vmem:[%s0 + $0x4] sm:$0xf]
  %v17 = vld [vmem:[%s0 + $0x8] sm:$0xf]
  %v18 = vld [vmem:[%s0 + $0xc] sm:$0xf]
  %v19 = vld [vmem:[%s1] sm:$0xf]
  %v20 = vld [vmem:[%s1 + $0x4] sm:$0xf]
  %v21 = vld [vmem:[%s1 + $0x8] sm:$0xf]
  %v22 = vld [vmem:[%s1 + $0xc] sm:$0xf]
  %v23 = vld [vmem:[%s1 + $0x10] sm:$0xf]
  %v24 = vld [vmem:[%s1 + $0x14] sm:$0xf]
  %v25 = vld [vmem:[%s1 + $0x18] sm:$0xf]
  %v26 = vld [vmem:[%s1 + $0x1c] sm:$0xf]
  %v27 = vld [vmem:[%s1 + $0x20] sm:$0xf]
  %v28 = vld [vmem:[%s1 + $0x24] sm:$0xf]
  %v29 = vld [vmem:[%s1 + $0x28] sm:$0xf]
  %v30 = vld [vmem:[%s1 + $0x2c] sm:$0xf]
  %v31 = vld [vmem:[%s1 + $0x30] sm:$0xf]
  %v32 = vld [vmem:[%s1 + $0x34] sm:$0xf]
  %v33 = vld [vmem:[%s1 + $0x38] sm:$0xf]
  %v34 = vld [vmem:[%s1 + $0x3c] sm:$0xf]
  %v35 = vld [vmem:[%s2] sm:$0x1]
  %v37 = vlaneseq
  %v38 = vshrl.u32 %v37, 7
  %v39 = vsub.s32 0, %v38
  %v40 = vrot.slane %v35, %v39
  %v46 = vunpack.c.l.b16 %v15
  %v47 = vunpack.c.l.b16 %v16
  %v48 = vunpack.c.l.b16 %v17
  %v49 = vunpack.c.l.b16 %v18
  %v50 = vpack.c.b16 %v47, %v46
  %v51 = vpack.c.b16 %v49, %v48
  %v70 = vunpack.c.l.b16 %v19
  %v71 = vunpack.c.l.b16 %v20
  %v72 = vunpack.c.l.b16 %v21
  %v73 = vunpack.c.l.b16 %v22
  %v74 = vunpack.c.l.b16 %v23
  %v75 = vunpack.c.l.b16 %v24
  %v76 = vunpack.c.l.b16 %v25
  %v77 = vunpack.c.l.b16 %v26
  %v78 = vunpack.c.l.b16 %v27
  %v79 = vunpack.c.l.b16 %v28
  %v80 = vunpack.c.l.b16 %v29
  %v81 = vunpack.c.l.b16 %v30
  %v82 = vunpack.c.l.b16 %v31
  %v83 = vunpack.c.l.b16 %v32
  %v84 = vunpack.c.l.b16 %v33
  %v85 = vunpack.c.l.b16 %v34
  %v86 = vpack.c.b16 %v71, %v70
  %v87 = vpack.c.b16 %v73, %v72
  %v88 = vpack.c.b16 %v75, %v74
  %v89 = vpack.c.b16 %v77, %v76
  %v90 = vpack.c.b16 %v79, %v78
  %v91 = vpack.c.b16 %v81, %v80
  %v92 = vpack.c.b16 %v83, %v82
  %v93 = vpack.c.b16 %v85, %v84
  %102 = vmatprep.subr.bf16.mxu0 0
  %103 = vmatpush1.bf16.msra.mxu0 %v93
  %104 = vmatprep.subr.bf16.mxu0 0
  %105 = vmatpush1.bf16.msra.mxu0 %v92
  %106 = vmatprep.subr.bf16.mxu0 0
  %107 = vmatpush1.bf16.msra.mxu0 %v91
  %108 = vmatprep.subr.bf16.mxu0 0
  %109 = vmatpush1.bf16.msra.mxu0 %v90
  %110 = vmatprep.subr.bf16.mxu0 0
  %111 = vmatpush1.bf16.msra.mxu0 %v89
  %112 = vmatprep.subr.bf16.mxu0 0
  %113 = vmatpush1.bf16.msra.mxu0 %v88
  %114 = vmatprep.subr.bf16.mxu0 0
  %115 = vmatpush1.bf16.msra.mxu0 %v87
  %116 = vmatprep.subr.bf16.mxu0 0
  %117 = vmatpush1.bf16.msra.mxu0 %v86
  %118 = vmatprep.subr.bf16.mxu0 0
  %119 = vmatpush2.bf16.msra.mxu0 0
  %120 = vmatprep.subr.bf16.mxu0 0
  %121 = vmatpush2.bf16.msra.mxu0 0
  %122 = vmatprep.subr.bf16.mxu0 0
  %123 = vmatpush2.bf16.msra.mxu0 0
  %124 = vmatprep.subr.bf16.mxu0 0
  %125 = vmatpush2.bf16.msra.mxu0 0
  %126 = vmatprep.subr.bf16.mxu0 0
  %127 = vmatpush2.bf16.msra.mxu0 0
  %128 = vmatprep.subr.bf16.mxu0 0
  %129 = vmatpush2.bf16.msra.mxu0 0
  %130 = vmatprep.subr.bf16.mxu0 0
  %131 = vmatpush2.bf16.msra.mxu0 0
  %132 = vmatprep.subr.bf16.mxu0 0
  %133 = vmatpush2.bf16.msra.mxu0 0
  %134 = vmatprep.mubr.bf16.mxu0 0
  %135 = vmatmul.mubr.bf16.gmra.mxu0 %v50
  %v136 = vpop.f32.mrf.mxu0
  %v137 = vadd.f32 %v40, %v136
  %v138 = vpop.f32.mrf.mxu0
  %v139 = vpop.f32.mrf.mxu0
  %v140 = vadd.f32 %v40, %v139
  %v141 = vpop.f32.mrf.mxu0
  %142 = vmatprep.mubr.bf16.mxu0 0
  %143 = vmatmul.mubr.bf16.gmra.mxu0 %v51
  %v144 = vpop.f32.mrf.mxu0
  %v145 = vadd.f32 %v40, %v144
  %v146 = vpop.f32.mrf.mxu0
  %v147 = vpop.f32.mrf.mxu0
  %v148 = vadd.f32 %v40, %v147
  %v149 = vpop.f32.mrf.mxu0
  %150 = vdwg.mxu0
  %v151 = vmax.f32 %v137, 0.0
  %v152 = vmax.f32 %v140, 0.0
  %v153 = vmax.f32 %v145, 0.0
  %v154 = vmax.f32 %v148, 0.0
  %v155 = vpack.c.bf16 %v152, %v151
  %v156 = vpack.c.bf16 %v154, %v153
  %v159 = vunpack.c.l.b16 %v155
  %v160 = vunpack.c.h.b16 %v155
  %v161 = vunpack.c.l.b16 %v156
  %v162 = vunpack.c.h.b16 %v156
  %v163 = vpack.c.b16 %v159, %v159
  %v164 = vpack.c.b16 %v160, %v160
  %v165 = vpack.c.b16 %v161, %v161
  %v166 = vpack.c.b16 %v162, %v162
  %vm171 = vcmask 519168
  %172 = vst.msk [vmem:[%s3] sm:$0xf] %vm171, %v163
  %173 = vst.msk [vmem:[%s3 + $0x4] sm:$0xf] %vm171, %v164
  %174 = vst.msk [vmem:[%s3 + $0x8] sm:$0xf] %vm171, %v165
  %175 = vst.msk [vmem:[%s3 + $0xc] sm:$0xf] %vm171, %v166
  // Predicated region
  $region14: #{pneumonia_autoencoder_forward.10} parent=0 // pred_check
    _
  $region15: #{pneumonia_autoencoder_forward.10} parent=0 // pred_check_branch
    %177 = sbr.rel (0) target = $region17
  $region16: #{pneumonia_autoencoder_forward.10} parent=0 // pred_region
    _
  $region17: #{pneumonia_autoencoder_forward.10} parent=0 // pred_fallthru
    _
  // Predicated region
  $region18: #{pneumonia_autoencoder_forward.10} parent=0 // pred_check
    _
  $region19: #{pneumonia_autoencoder_forward.10} parent=0 // pred_check_branch
    %179 = sbr.rel (0) target = $region21
  $region20: #{pneumonia_autoencoder_forward.10} parent=0 // pred_region
    _
  $region21: #{pneumonia_autoencoder_forward.10} parent=0 // pred_fallthru
    _

// kernel: pneumonia_autoencoder_forward.9
$region0: #{pneumonia_autoencoder_forward.9}
  #allocation0 [shape = 'u32[]', space=smem, size = 0x4, offset = 0x4, fixed_abs, tag = 'smem constant byte address 0x4 - core index']
  #allocation1 [shape = 'u32[144,128]{1,0:T(1,128)}', space=vmem, size = 0x12000, scoped, tag = 'internal scratch']
  %s0 = inlined_call_operand.vmem [shape: bf16[16,256], index: 0, kind: input, shape index: {}]
  %s1 = inlined_call_operand.vmem [shape: bf16[256,128], index: 1, kind: input, shape index: {}]
  %s2 = inlined_call_operand.vmem [shape: f32[1,128], index: 2, kind: input, shape index: {}]
  %s3 = inlined_call_operand.vmem [shape: bf16[16,128], index: 3, kind: output, shape index: {}]
  %s4 = sld [smem:[#allocation0]]
  $region22: #{pneumonia_autoencoder_forward.9} parent=0
    _
  %s6 = ssub.s32 1, %s4
  %s7 = scalar_select 0, %s6, %s4
  // Predicated region
  $region2: #{pneumonia_autoencoder_forward.9} parent=0 // pred_check
    _
  $region3: #{pneumonia_autoencoder_forward.9} parent=0 // pred_check_branch
    %9 = sbr.rel (0) target = $region5
  $region4: #{pneumonia_autoencoder_forward.9} parent=0 // pred_region
    _
  $region5: #{pneumonia_autoencoder_forward.9} parent=0 // pred_fallthru
    _
  // Predicated region
  $region6: #{pneumonia_autoencoder_forward.9} parent=0 // pred_check
    _
  $region7: #{pneumonia_autoencoder_forward.9} parent=0 // pred_check_branch
    %11 = sbr.rel (0) target = $region9
  $region8: #{pneumonia_autoencoder_forward.9} parent=0 // pred_region
    _
  $region9: #{pneumonia_autoencoder_forward.9} parent=0 // pred_fallthru
    _
  // Predicated region
  $region10: #{pneumonia_autoencoder_forward.9} parent=0 // pred_check
    _
  $region11: #{pneumonia_autoencoder_forward.9} parent=0 // pred_check_branch
    %13 = sbr.rel (0) target = $region13
  $region12: #{pneumonia_autoencoder_forward.9} parent=0 // pred_region
    _
  $region13: #{pneumonia_autoencoder_forward.9} parent=0 // pred_fallthru
    _
  %v15 = vld [vmem:[%s0] sm:$0xff]
  %v16 = vld [vmem:[%s0 + $0x8] sm:$0xff]
  %v17 = vld [vmem:[%s1] sm:$0xf]
  %v18 = vld [vmem:[%s1 + $0x4] sm:$0xf]
  %v19 = vld [vmem:[%s1 + $0x8] sm:$0xf]
  %v20 = vld [vmem:[%s1 + $0xc] sm:$0xf]
  %v21 = vld [vmem:[%s1 + $0x10] sm:$0xf]
  %v22 = vld [vmem:[%s1 + $0x14] sm:$0xf]
  %v23 = vld [vmem:[%s1 + $0x18] sm:$0xf]
  %v24 = vld [vmem:[%s1 + $0x1c] sm:$0xf]
  %v25 = vld [vmem:[%s1 + $0x20] sm:$0xf]
  %v26 = vld [vmem:[%s1 + $0x24] sm:$0xf]
  %v27 = vld [vmem:[%s1 + $0x28] sm:$0xf]
  %v28 = vld [vmem:[%s1 + $0x2c] sm:$0xf]
  %v29 = vld [vmem:[%s1 + $0x30] sm:$0xf]
  %v30 = vld [vmem:[%s1 + $0x34] sm:$0xf]
  %v31 = vld [vmem:[%s1 + $0x38] sm:$0xf]
  %v32 = vld [vmem:[%s1 + $0x3c] sm:$0xf]
  %v33 = vld [vmem:[%s1 + $0x40] sm:$0xf]
  %v34 = vld [vmem:[%s1 + $0x44] sm:$0xf]
  %v35 = vld [vmem:[%s1 + $0x48] sm:$0xf]
  %v36 = vld [vmem:[%s1 + $0x4c] sm:$0xf]
  %v37 = vld [vmem:[%s1 + $0x50] sm:$0xf]
  %v38 = vld [vmem:[%s1 + $0x54] sm:$0xf]
  %v39 = vld [vmem:[%s1 + $0x58] sm:$0xf]
  %v40 = vld [vmem:[%s1 + $0x5c] sm:$0xf]
  %v41 = vld [vmem:[%s1 + $0x60] sm:$0xf]
  %v42 = vld [vmem:[%s1 + $0x64] sm:$0xf]
  %v43 = vld [vmem:[%s1 + $0x68] sm:$0xf]
  %v44 = vld [vmem:[%s1 + $0x6c] sm:$0xf]
  %v45 = vld [vmem:[%s1 + $0x70] sm:$0xf]
  %v46 = vld [vmem:[%s1 + $0x74] sm:$0xf]
  %v47 = vld [vmem:[%s1 + $0x78] sm:$0xf]
  %v48 = vld [vmem:[%s1 + $0x7c] sm:$0xf]
  %v49 = vld [vmem:[%s2] sm:$0x1]
  %v51 = vlaneseq
  %v52 = vshrl.u32 %v51, 7
  %v53 = vsub.s32 0, %v52
  %v54 = vrot.slane %v49, %v53
  %v58 = vunpack.c.l.b16 %v15
  %v59 = vunpack.c.h.b16 %v15
  %v60 = vunpack.c.l.b16 %v16
  %v61 = vunpack.c.h.b16 %v16
  %v62 = vpack.c.b16 %v60, %v58
  %v63 = vpack.c.b16 %v61, %v59
  %v98 = vunpack.c.l.b16 %v17
  %v99 = vunpack.c.l.b16 %v18
  %v100 = vunpack.c.l.b16 %v19
  %v101 = vunpack.c.l.b16 %v20
  %v102 = vunpack.c.l.b16 %v21
  %v103 = vunpack.c.l.b16 %v22
  %v104 = vunpack.c.l.b16 %v23
  %v105 = vunpack.c.l.b16 %v24
  %v106 = vunpack.c.l.b16 %v25
  %v107 = vunpack.c.l.b16 %v26
  %v108 = vunpack.c.l.b16 %v27
  %v109 = vunpack.c.l.b16 %v28
  %v110 = vunpack.c.l.b16 %v29
  %v111 = vunpack.c.l.b16 %v30
  %v112 = vunpack.c.l.b16 %v31
  %v113 = vunpack.c.l.b16 %v32
  %v114 = vunpack.c.l.b16 %v33
  %v115 = vunpack.c.l.b16 %v34
  %v116 = vunpack.c.l.b16 %v35
  %v117 = vunpack.c.l.b16 %v36
  %v118 = vunpack.c.l.b16 %v37
  %v119 = vunpack.c.l.b16 %v38
  %v120 = vunpack.c.l.b16 %v39
  %v121 = vunpack.c.l.b16 %v40
  %v122 = vunpack.c.l.b16 %v41
  %v123 = vunpack.c.l.b16 %v42
  %v124 = vunpack.c.l.b16 %v43
  %v125 = vunpack.c.l.b16 %v44
  %v126 = vunpack.c.l.b16 %v45
  %v127 = vunpack.c.l.b16 %v46
  %v128 = vunpack.c.l.b16 %v47
  %v129 = vunpack.c.l.b16 %v48
  %v130 = vpack.c.b16 %v99, %v98
  %v131 = vpack.c.b16 %v101, %v100
  %v132 = vpack.c.b16 %v103, %v102
  %v133 = vpack.c.b16 %v105, %v104
  %v134 = vpack.c.b16 %v107, %v106
  %v135 = vpack.c.b16 %v109, %v108
  %v136 = vpack.c.b16 %v111, %v110
  %v137 = vpack.c.b16 %v113, %v112
  %v138 = vpack.c.b16 %v115, %v114
  %v139 = vpack.c.b16 %v117, %v116
  %v140 = vpack.c.b16 %v119, %v118
  %v141 = vpack.c.b16 %v121, %v120
  %v142 = vpack.c.b16 %v123, %v122
  %v143 = vpack.c.b16 %v125, %v124
  %v144 = vpack.c.b16 %v127, %v126
  %v145 = vpack.c.b16 %v129, %v128
  %162 = vmatprep.subr.bf16.mxu0 0
  %163 = vmatpush1.bf16.msra.mxu0 %v137
  %164 = vmatprep.subr.bf16.mxu0 0
  %165 = vmatpush1.bf16.msra.mxu0 %v136
  %166 = vmatprep.subr.bf16.mxu0 0
  %167 = vmatpush1.bf16.msra.mxu0 %v135
  %168 = vmatprep.subr.bf16.mxu0 0
  %169 = vmatpush1.bf16.msra.mxu0 %v134
  %170 = vmatprep.subr.bf16.mxu0 0
  %171 = vmatpush1.bf16.msra.mxu0 %v133
  %172 = vmatprep.subr.bf16.mxu0 0
  %173 = vmatpush1.bf16.msra.mxu0 %v132
  %174 = vmatprep.subr.bf16.mxu0 0
  %175 = vmatpush1.bf16.msra.mxu0 %v131
  %176 = vmatprep.subr.bf16.mxu0 0
  %177 = vmatpush1.bf16.msra.mxu0 %v130
  %178 = vmatprep.subr.bf16.mxu0 0
  %179 = vmatpush2.bf16.msra.mxu0 %v145
  %180 = vmatprep.subr.bf16.mxu0 0
  %181 = vmatpush2.bf16.msra.mxu0 %v144
  %182 = vmatprep.subr.bf16.mxu0 0
  %183 = vmatpush2.bf16.msra.mxu0 %v143
  %184 = vmatprep.subr.bf16.mxu0 0
  %185 = vmatpush2.bf16.msra.mxu0 %v142
  %186 = vmatprep.subr.bf16.mxu0 0
  %187 = vmatpush2.bf16.msra.mxu0 %v141
  %188 = vmatprep.subr.bf16.mxu0 0
  %189 = vmatpush2.bf16.msra.mxu0 %v140
  %190 = vmatprep.subr.bf16.mxu0 0
  %191 = vmatpush2.bf16.msra.mxu0 %v139
  %192 = vmatprep.subr.bf16.mxu0 0
  %193 = vmatpush2.bf16.msra.mxu0 %v138
  %194 = vmatprep.mubr.bf16.mxu0 %v63
  %195 = vmatmul.mubr.bf16.gmra.mxu0 %v62
  %v196 = vpop.f32.mrf.mxu0
  %v197 = vadd.f32 %v54, %v196
  %v198 = vpop.f32.mrf.mxu0
  %v199 = vpop.f32.mrf.mxu0
  %v200 = vadd.f32 %v54, %v199
  %v201 = vpop.f32.mrf.mxu0
  %202 = vdwg.mxu0
  %v203 = vmax.f32 %v197, 0.0
  %v204 = vmax.f32 %v200, 0.0
  %v205 = vpack.c.bf16 %v204, %v203
  %v207 = vunpack.c.l.b16 %v205
  %v208 = vunpack.c.h.b16 %v205
  %v209 = vpack.c.b16 %v207, %v207
  %v210 = vpack.c.b16 %v208, %v208
  %213 = vst [vmem:[%s3] sm:$0xf] %v209
  %214 = vst [vmem:[%s3 + $0x4] sm:$0xf] %v210
  // Predicated region
  $region14: #{pneumonia_autoencoder_forward.9} parent=0 // pred_check
    _
  $region15: #{pneumonia_autoencoder_forward.9} parent=0 // pred_check_branch
    %216 = sbr.rel (0) target = $region17
  $region16: #{pneumonia_autoencoder_forward.9} parent=0 // pred_region
    _
  $region17: #{pneumonia_autoencoder_forward.9} parent=0 // pred_fallthru
    _
  // Predicated region
  $region18: #{pneumonia_autoencoder_forward.9} parent=0 // pred_check
    _
  $region19: #{pneumonia_autoencoder_forward.9} parent=0 // pred_check_branch
    %218 = sbr.rel (0) target = $region21
  $region20: #{pneumonia_autoencoder_forward.9} parent=0 // pred_region
    _
  $region21: #{pneumonia_autoencoder_forward.9} parent=0 // pred_fallthru
    _

// kernel: pneumonia_autoencoder_forward.11
$region0: #{pneumonia_autoencoder_forward.11}
  #allocation0 [shape = 'u32[]', space=smem, size = 0x4, offset = 0x4, fixed_abs, tag = 'smem constant byte address 0x4 - core index']
  #allocation1 [shape = 'u32[144,128]{1,0:T(1,128)}', space=vmem, size = 0x12000, scoped, tag = 'internal scratch']
  %s0 = inlined_call_operand.vmem [shape: bf16[128,64], index: 0, kind: input, shape index: {}]
  %s1 = inlined_call_operand.vmem [shape: bf16[64,4], index: 1, kind: input, shape index: {}]
  %s2 = inlined_call_operand.vmem [shape: f32[1,4], index: 2, kind: input, shape index: {}]
  %s3 = inlined_call_operand.vmem [shape: f32[128,4], index: 3, kind: output, shape index: {}]
  %s4 = sld [smem:[#allocation0]]
  $region22: #{pneumonia_autoencoder_forward.11} parent=0
    _
  %s6 = ssub.s32 1, %s4
  %s7 = scalar_select 0, %s6, %s4
  // Predicated region
  $region2: #{pneumonia_autoencoder_forward.11} parent=0 // pred_check
    _
  $region3: #{pneumonia_autoencoder_forward.11} parent=0 // pred_check_branch
    %9 = sbr.rel (0) target = $region5
  $region4: #{pneumonia_autoencoder_forward.11} parent=0 // pred_region
    _
  $region5: #{pneumonia_autoencoder_forward.11} parent=0 // pred_fallthru
    _
  // Predicated region
  $region6: #{pneumonia_autoencoder_forward.11} parent=0 // pred_check
    _
  $region7: #{pneumonia_autoencoder_forward.11} parent=0 // pred_check_branch
    %11 = sbr.rel (0) target = $region9
  $region8: #{pneumonia_autoencoder_forward.11} parent=0 // pred_region
    _
  $region9: #{pneumonia_autoencoder_forward.11} parent=0 // pred_fallthru
    _
  // Predicated region
  $region10: #{pneumonia_autoencoder_forward.11} parent=0 // pred_check
    _
  $region11: #{pneumonia_autoencoder_forward.11} parent=0 // pred_check_branch
    %13 = sbr.rel (0) target = $region13
  $region12: #{pneumonia_autoencoder_forward.11} parent=0 // pred_region
    _
  $region13: #{pneumonia_autoencoder_forward.11} parent=0 // pred_fallthru
    _
  %v15 = vld [vmem:[%s0] sm:$0xf]
  %v16 = vld [vmem:[%s0 + $0x4] sm:$0xf]
  %v17 = vld [vmem:[%s0 + $0x8] sm:$0xf]
  %v18 = vld [vmem:[%s0 + $0xc] sm:$0xf]
  %v19 = vld [vmem:[%s0 + $0x10] sm:$0xf]
  %v20 = vld [vmem:[%s0 + $0x14] sm:$0xf]
  %v21 = vld [vmem:[%s0 + $0x18] sm:$0xf]
  %v22 = vld [vmem:[%s0 + $0x1c] sm:$0xf]
  %v23 = vld [vmem:[%s0 + $0x20] sm:$0xf]
  %v24 = vld [vmem:[%s0 + $0x24] sm:$0xf]
  %v25 = vld [vmem:[%s0 + $0x28] sm:$0xf]
  %v26 = vld [vmem:[%s0 + $0x2c] sm:$0xf]
  %v27 = vld [vmem:[%s0 + $0x30] sm:$0xf]
  %v28 = vld [vmem:[%s0 + $0x34] sm:$0xf]
  %v29 = vld [vmem:[%s0 + $0x38] sm:$0xf]
  %v30 = vld [vmem:[%s0 + $0x3c] sm:$0xf]
  %v31 = vld [vmem:[%s1] sm:$0xf]
  %v32 = vld [vmem:[%s1 + $0x4] sm:$0xf]
  %v33 = vld [vmem:[%s1 + $0x8] sm:$0xf]
  %v34 = vld [vmem:[%s1 + $0xc] sm:$0xf]
  %v35 = vld [vmem:[%s1 + $0x10] sm:$0xf]
  %v36 = vld [vmem:[%s1 + $0x14] sm:$0xf]
  %v37 = vld [vmem:[%s1 + $0x18] sm:$0xf]
  %v38 = vld [vmem:[%s1 + $0x1c] sm:$0xf]
  %v39 = vld [vmem:[%s2] sm:$0x1]
  %v41 = vlaneseq
  %v42 = vshrl.u32 %v41, 7
  %v43 = vsub.s32 0, %v42
  %v44 = vrot.slane %v39, %v43
  %v62 = vunpack.c.l.b16 %v15
  %v63 = vunpack.c.l.b16 %v16
  %v64 = vunpack.c.l.b16 %v17
  %v65 = vunpack.c.l.b16 %v18
  %v66 = vunpack.c.l.b16 %v19
  %v67 = vunpack.c.l.b16 %v20
  %v68 = vunpack.c.l.b16 %v21
  %v69 = vunpack.c.l.b16 %v22
  %v70 = vunpack.c.l.b16 %v23
  %v71 = vunpack.c.l.b16 %v24
  %v72 = vunpack.c.l.b16 %v25
  %v73 = vunpack.c.l.b16 %v26
  %v74 = vunpack.c.l.b16 %v27
  %v75 = vunpack.c.l.b16 %v28
  %v76 = vunpack.c.l.b16 %v29
  %v77 = vunpack.c.l.b16 %v30
  %v78 = vpack.c.b16 %v63, %v62
  %v79 = vpack.c.b16 %v65, %v64
  %v80 = vpack.c.b16 %v67, %v66
  %v81 = vpack.c.b16 %v69, %v68
  %v82 = vpack.c.b16 %v71, %v70
  %v83 = vpack.c.b16 %v73, %v72
  %v84 = vpack.c.b16 %v75, %v74
  %v85 = vpack.c.b16 %v77, %v76
  %v94 = vunpack.c.l.b16 %v31
  %v95 = vunpack.c.l.b16 %v32
  %v96 = vunpack.c.l.b16 %v33
  %v97 = vunpack.c.l.b16 %v34
  %v98 = vunpack.c.l.b16 %v35
  %v99 = vunpack.c.l.b16 %v36
  %v100 = vunpack.c.l.b16 %v37
  %v101 = vunpack.c.l.b16 %v38
  %v102 = vpack.c.b16 %v95, %v94
  %v103 = vpack.c.b16 %v97, %v96
  %v104 = vpack.c.b16 %v99, %v98
  %v105 = vpack.c.b16 %v101, %v100
  %vm110 = vcmask 523264
  %v112 = vsel %vm110, %v78, 0
  %v115 = vsel %vm110, %v79, 0
  %v118 = vsel %vm110, %v80, 0
  %v121 = vsel %vm110, %v81, 0
  %v124 = vsel %vm110, %v82, 0
  %v127 = vsel %vm110, %v83, 0
  %v130 = vsel %vm110, %v84, 0
  %v133 = vsel %vm110, %v85, 0
  %135 = vmatprep.subr.bf16.mxu0 0
  %136 = vmatpush1.bf16.msra.mxu0 0
  %137 = vmatprep.subr.bf16.mxu0 0
  %138 = vmatpush1.bf16.msra.mxu0 0
  %139 = vmatprep.subr.bf16.mxu0 0
  %140 = vmatpush1.bf16.msra.mxu0 0
  %141 = vmatprep.subr.bf16.mxu0 0
  %142 = vmatpush1.bf16.msra.mxu0 0
  %143 = vmatprep.subr.bf16.mxu0 0
  %144 = vmatpush1.bf16.msra.mxu0 %v105
  %145 = vmatprep.subr.bf16.mxu0 0
  %146 = vmatpush1.bf16.msra.mxu0 %v104
  %147 = vmatprep.subr.bf16.mxu0 0
  %148 = vmatpush1.bf16.msra.mxu0 %v103
  %149 = vmatprep.subr.bf16.mxu0 0
  %150 = vmatpush1.bf16.msra.mxu0 %v102
  %151 = vmatprep.subr.bf16.mxu0 0
  %152 = vmatpush2.bf16.msra.mxu0 0
  %153 = vmatprep.subr.bf16.mxu0 0
  %154 = vmatpush2.bf16.msra.mxu0 0
  %155 = vmatprep.subr.bf16.mxu0 0
  %156 = vmatpush2.bf16.msra.mxu0 0
  %157 = vmatprep.subr.bf16.mxu0 0
  %158 = vmatpush2.bf16.msra.mxu0 0
  %159 = vmatprep.subr.bf16.mxu0 0
  %160 = vmatpush2.bf16.msra.mxu0 0
  %161 = vmatprep.subr.bf16.mxu0 0
  %162 = vmatpush2.bf16.msra.mxu0 0
  %163 = vmatprep.subr.bf16.mxu0 0
  %164 = vmatpush2.bf16.msra.mxu0 0
  %165 = vmatprep.subr.bf16.mxu0 0
  %166 = vmatpush2.bf16.msra.mxu0 0
  %167 = vmatprep.mubr.bf16.mxu0 0
  %168 = vmatmul.mubr.bf16.gmra.mxu0 %v112
  %v169 = vpop.f32.mrf.mxu0
  %v170 = vadd.f32 %v44, %v169
  %v171 = vpop.f32.mrf.mxu0
  %v172 = vpop.f32.mrf.mxu0
  %v173 = vadd.f32 %v44, %v172
  %v174 = vpop.f32.mrf.mxu0
  %175 = vmatprep.mubr.bf16.mxu0 0
  %176 = vmatmul.mubr.bf16.gmra.mxu0 %v115
  %v177 = vpop.f32.mrf.mxu0
  %v178 = vadd.f32 %v44, %v177
  %v179 = vpop.f32.mrf.mxu0
  %v180 = vpop.f32.mrf.mxu0
  %v181 = vadd.f32 %v44, %v180
  %v182 = vpop.f32.mrf.mxu0
  %183 = vmatprep.mubr.bf16.mxu0 0
  %184 = vmatmul.mubr.bf16.gmra.mxu0 %v118
  %v185 = vpop.f32.mrf.mxu0
  %v186 = vadd.f32 %v44, %v185
  %v187 = vpop.f32.mrf.mxu0
  %v188 = vpop.f32.mrf.mxu0
  %v189 = vadd.f32 %v44, %v188
  %v190 = vpop.f32.mrf.mxu0
  %191 = vmatprep.mubr.bf16.mxu0 0
  %192 = vmatmul.mubr.bf16.gmra.mxu0 %v121
  %v193 = vpop.f32.mrf.mxu0
  %v194 = vadd.f32 %v44, %v193
  %v195 = vpop.f32.mrf.mxu0
  %v196 = vpop.f32.mrf.mxu0
  %v197 = vadd.f32 %v44, %v196
  %v198 = vpop.f32.mrf.mxu0
  %199 = vmatprep.mubr.bf16.mxu0 0
  %200 = vmatmul.mubr.bf16.gmra.mxu0 %v124
  %v201 = vpop.f32.mrf.mxu0
  %v202 = vadd.f32 %v44, %v201
  %v203 = vpop.f32.mrf.mxu0
  %v204 = vpop.f32.mrf.mxu0
  %v205 = vadd.f32 %v44, %v204
  %v206 = vpop.f32.mrf.mxu0
  %207 = vmatprep.mubr.bf16.mxu0 0
  %208 = vmatmul.mubr.bf16.gmra.mxu0 %v127
  %v209 = vpop.f32.mrf.mxu0
  %v210 = vadd.f32 %v44, %v209
  %v211 = vpop.f32.mrf.mxu0
  %v212 = vpop.f32.mrf.mxu0
  %v213 = vadd.f32 %v44, %v212
  %v214 = vpop.f32.mrf.mxu0
  %215 = vmatprep.mubr.bf16.mxu0 0
  %216 = vmatmul.mubr.bf16.gmra.mxu0 %v130
  %v217 = vpop.f32.mrf.mxu0
  %v218 = vadd.f32 %v44, %v217
  %v219 = vpop.f32.mrf.mxu0
  %v220 = vpop.f32.mrf.mxu0
  %v221 = vadd.f32 %v44, %v220
  %v222 = vpop.f32.mrf.mxu0
  %223 = vmatprep.mubr.bf16.mxu0 0
  %224 = vmatmul.mubr.bf16.gmra.mxu0 %v133
  %v225 = vpop.f32.mrf.mxu0
  %v226 = vadd.f32 %v44, %v225
  %v227 = vpop.f32.mrf.mxu0
  %v228 = vpop.f32.mrf.mxu0
  %v229 = vadd.f32 %v44, %v228
  %v230 = vpop.f32.mrf.mxu0
  %231 = vdwg.mxu0
  %v232 = vsub.f32 0.0, %v170
  %v233 = vsub.f32 0.0, %v173
  %v234 = vsub.f32 0.0, %v178
  %v235 = vsub.f32 0.0, %v181
  %v236 = vsub.f32 0.0, %v186
  %v237 = vsub.f32 0.0, %v189
  %v238 = vsub.f32 0.0, %v194
  %v239 = vsub.f32 0.0, %v197
  %v240 = vsub.f32 0.0, %v202
  %v241 = vsub.f32 0.0, %v205
  %v242 = vsub.f32 0.0, %v210
  %v243 = vsub.f32 0.0, %v213
  %v244 = vsub.f32 0.0, %v218
  %v245 = vsub.f32 0.0, %v221
  %v246 = vsub.f32 0.0, %v226
  %v247 = vsub.f32 0.0, %v229
  %v248 = vmul.f32 %v232, 1.442695
  %v249 = vpow.pop %v248
  %v250 = vmul.f32 %v233, 1.442695
  %v251 = vpow.pop %v250
  %v252 = vmul.f32 %v234, 1.442695
  %v253 = vpow.pop %v252
  %v254 = vmul.f32 %v235, 1.442695
  %v255 = vpow.pop %v254
  %v256 = vmul.f32 %v236, 1.442695
  %v257 = vpow.pop %v256
  %v258 = vmul.f32 %v237, 1.442695
  %v259 = vpow.pop %v258
  %v260 = vmul.f32 %v238, 1.442695
  %v261 = vpow.pop %v260
  %v262 = vmul.f32 %v239, 1.442695
  %v263 = vpow.pop %v262
  %v264 = vmul.f32 %v240, 1.442695
  %v265 = vpow.pop %v264
  %v266 = vmul.f32 %v241, 1.442695
  %v267 = vpow.pop %v266
  %v268 = vmul.f32 %v242, 1.442695
  %v269 = vpow.pop %v268
  %v270 = vmul.f32 %v243, 1.442695
  %v271 = vpow.pop %v270
  %v272 = vmul.f32 %v244, 1.442695
  %v273 = vpow.pop %v272
  %v274 = vmul.f32 %v245, 1.442695
  %v275 = vpow.pop %v274
  %v276 = vmul.f32 %v246, 1.442695
  %v277 = vpow.pop %v276
  %v278 = vmul.f32 %v247, 1.442695
  %v279 = vpow.pop %v278
  %v280 = vadd.f32 %v249, 1.0
  %v281 = vadd.f32 %v251, 1.0
  %v282 = vadd.f32 %v253, 1.0
  %v283 = vadd.f32 %v255, 1.0
  %v284 = vadd.f32 %v257, 1.0
  %v285 = vadd.f32 %v259, 1.0
  %v286 = vadd.f32 %v261, 1.0
  %v287 = vadd.f32 %v263, 1.0
  %v288 = vadd.f32 %v265, 1.0
  %v289 = vadd.f32 %v267, 1.0
  %v290 = vadd.f32 %v269, 1.0
  %v291 = vadd.f32 %v271, 1.0
  %v292 = vadd.f32 %v273, 1.0
  %v293 = vadd.f32 %v275, 1.0
  %v294 = vadd.f32 %v277, 1.0
  %v295 = vadd.f32 %v279, 1.0
  %v296 = vrcp.pop %v280
  %v297 = vrcp.pop %v281
  %v298 = vrcp.pop %v282
  %v299 = vrcp.pop %v283
  %v300 = vrcp.pop %v284
  %v301 = vrcp.pop %v285
  %v302 = vrcp.pop %v286
  %v303 = vrcp.pop %v287
  %v304 = vrcp.pop %v288
  %v305 = vrcp.pop %v289
  %v306 = vrcp.pop %v290
  %v307 = vrcp.pop %v291
  %v308 = vrcp.pop %v292
  %v309 = vrcp.pop %v293
  %v310 = vrcp.pop %v294
  %v311 = vrcp.pop %v295
  %vm312 = vcmask 31744
  %313 = vst.msk [vmem:[%s3] sm:$0xff] %vm312, %v296
  %314 = vst.msk [vmem:[%s3 + $0x8] sm:$0xff] %vm312, %v297
  %315 = vst.msk [vmem:[%s3 + $0x10] sm:$0xff] %vm312, %v298
  %316 = vst.msk [vmem:[%s3 + $0x18] sm:$0xff] %vm312, %v299
  %317 = vst.msk [vmem:[%s3 + $0x20] sm:$0xff] %vm312, %v300
  %318 = vst.msk [vmem:[%s3 + $0x28] sm:$0xff] %vm312, %v301
  %319 = vst.msk [vmem:[%s3 + $0x30] sm:$0xff] %vm312, %v302
  %320 = vst.msk [vmem:[%s3 + $0x38] sm:$0xff] %vm312, %v303
  %321 = vst.msk [vmem:[%s3 + $0x40] sm:$0xff] %vm312, %v304
  %322 = vst.msk [vmem:[%s3 + $0x48] sm:$0xff] %vm312, %v305
  %323 = vst.msk [vmem:[%s3 + $0x50] sm:$0xff] %vm312, %v306
  %324 = vst.msk [vmem:[%s3 + $0x58] sm:$0xff] %vm312, %v307
  %325 = vst.msk [vmem:[%s3 + $0x60] sm:$0xff] %vm312, %v308
  %326 = vst.msk [vmem:[%s3 + $0x68] sm:$0xff] %vm312, %v309
  %327 = vst.msk [vmem:[%s3 + $0x70] sm:$0xff] %vm312, %v310
  %328 = vst.msk [vmem:[%s3 + $0x78] sm:$0xff] %vm312, %v311
  // Predicated region
  $region14: #{pneumonia_autoencoder_forward.11} parent=0 // pred_check
    _
  $region15: #{pneumonia_autoencoder_forward.11} parent=0 // pred_check_branch
    %330 = sbr.rel (0) target = $region17
  $region16: #{pneumonia_autoencoder_forward.11} parent=0 // pred_region
    _
  $region17: #{pneumonia_autoencoder_forward.11} parent=0 // pred_fallthru
    _
  // Predicated region
  $region18: #{pneumonia_autoencoder_forward.11} parent=0 // pred_check
    _
  $region19: #{pneumonia_autoencoder_forward.11} parent=0 // pred_check_branch
    %332 = sbr.rel (0) target = $region21
  $region20: #{pneumonia_autoencoder_forward.11} parent=0 // pred_region
    _
  $region21: #{pneumonia_autoencoder_forward.11} parent=0 // pred_fallthru
    _

</llo_original>
